<compile_context>
chip_gen: v7x
topology: tpu7x:2x2x1
jax: 0.10.0
libtpu: 0.0.40
codegen_flags: <defaults>
</compile_context>

<pallas_src>
import math
from functools import partial

import numpy as np
import jax
import jax.numpy as jnp
from jax.experimental import pallas as pl
from jax.experimental.pallas import tpu as pltpu

# ----------------------------------------------------------------------------
# Small synthetic config (mirrors the fields the PyTorch module reads)
# ----------------------------------------------------------------------------
config = dict(
    vocab_size=128,
    hidden_size=64,
    intermediate_size=128,
    num_hidden_layers=2,
    num_attention_heads=4,
    num_key_value_heads=2,
    head_dim=16,
    attention_bias=False,
    attention_dropout=0.0,
    mlp_bias=False,
    rms_norm_eps=1e-6,
    max_position_embeddings=64,
    rope_theta=10000.0,
    rope_scaling=dict(
        rope_type="llama3",
        factor=8.0,
        low_freq_factor=1.0,
        high_freq_factor=4.0,
        original_max_position_embeddings=32,
    ),
)

HID = config["hidden_size"]
N_HEADS = config["num_attention_heads"]
N_KV = config["num_key_value_heads"]
HEAD_DIM = config["head_dim"]
GROUPS = N_HEADS // N_KV
INTER = config["intermediate_size"]
EPS = config["rms_norm_eps"]
SCALING = HEAD_DIM ** (-0.5)
N_LAYERS = config["num_hidden_layers"]

Q_DIM = N_HEADS * HEAD_DIM          # 64
KV_DIM = N_KV * HEAD_DIM            # 32
QKV_DIM = Q_DIM + 2 * KV_DIM        # 128  (lane-dense packed projection)
GU_DIM = 2 * INTER                  # 256  (lane-dense packed gate|up)

PARAM_DT = jnp.bfloat16             # MXU operand dtype for the big weight matmuls


# ----------------------------------------------------------------------------
# Rotary embedding precompute (llama3 rope scaling) — plain JAX glue
# ----------------------------------------------------------------------------
def get_inv_freq_llama3(cfg):
    base = cfg["rope_theta"]
    dim = cfg["head_dim"]
    inv_freq = 1.0 / (base ** (jnp.arange(0, dim, 2, dtype=jnp.float32) / dim))
    rs = cfg["rope_scaling"]
    factor = rs["factor"]
    low_f = rs["low_freq_factor"]
    high_f = rs["high_freq_factor"]
    old_len = rs["original_max_position_embeddings"]
    low_wl = old_len / low_f
    high_wl = old_len / high_f
    wavelen = 2.0 * math.pi / inv_freq
    inv_freq_llama = jnp.where(wavelen > low_wl, inv_freq / factor, inv_freq)
    smooth = (old_len / wavelen - low_f) / (high_f - low_f)
    smoothed = (1.0 - smooth) / factor * inv_freq + smooth * inv_freq
    is_medium = (~(wavelen < high_wl)) & (~(wavelen > low_wl))
    inv_freq_llama = jnp.where(is_medium, smoothed, inv_freq_llama)
    attention_scaling = 1.0
    return inv_freq_llama, attention_scaling


def rotary_cos_sin(position_ids, cfg):
    # position_ids: (1, S) int32 -> cos/sin: (S, head_dim) float32
    inv_freq, att_scale = get_inv_freq_llama3(cfg)
    pos = position_ids[0].astype(jnp.float32)             # (S,)
    freqs = pos[:, None] * inv_freq[None, :]              # (S, head_dim//2)
    emb = jnp.concatenate([freqs, freqs], axis=-1)        # (S, head_dim)
    return jnp.cos(emb) * att_scale, jnp.sin(emb) * att_scale


def _build_rope_rot_matrix():
    """Signed permutation R such that (qkv @ R) == rotate_half per head on the
    q and k column blocks and zero on the v block."""
    half = HEAD_DIM // 2
    R = np.zeros((QKV_DIM, QKV_DIM), np.float32)
    for base, n_heads in ((0, N_HEADS), (Q_DIM, N_KV)):   # v block stays zero
        for h in range(n_heads):
            off = base + h * HEAD_DIM
            for j in range(half):
                R[off + j + half, off + j] = -1.0   # out[:, j]       = -t[:, j+half]
                R[off + j, off + j + half] = 1.0    # out[:, j+half]  = +t[:, j]
    return jnp.asarray(R)


ROT_MAT = _build_rope_rot_matrix()


# ----------------------------------------------------------------------------
# Fused whole-model Pallas kernel: grid axis = layer index
# ----------------------------------------------------------------------------
def fused_llama_kernel(x_ref, cos_ref, sin_ref, rot_ref,
                       ln1_ref, wqkv_ref, wo_ref, ln2_ref, wgu_ref, wd_ref,
                       fln_ref, out_ref, h_ref):
    l = pl.program_id(0)
    S = x_ref.shape[0]

    # Seed the carried residual stream at layer 0.
    @pl.when(l == 0)
    def _():
        h_ref[...] = x_ref[...]

    h = h_ref[...]                                          # (S, H) f32

    # ---- input RMSNorm (f32) ----
    var = jnp.mean(h * h, axis=-1, keepdims=True)
    normed = (h * jax.lax.rsqrt(var + EPS)) * ln1_ref[0]

    # ---- packed QKV projection: single lane-dense MXU call ----
    qkv = jnp.dot(normed.astype(PARAM_DT), wqkv_ref[0],
                  preferred_element_type=jnp.float32)       # (S, QKV_DIM) f32

    # ---- RoPE once on the packed tensor (rotate_half via one MXU matmul) ----
    qkv_rot = jnp.dot(qkv, rot_ref[...], preferred_element_type=jnp.float32)
    qkv = qkv * cos_ref[...] + qkv_rot * sin_ref[...]

    q = qkv[:, :Q_DIM]
    k = qkv[:, Q_DIM:Q_DIM + KV_DIM]
    v = qkv[:, Q_DIM + KV_DIM:]

    # ---- causal mask generated in-kernel (no HBM/VMEM mask input) ----
    row = jax.lax.broadcasted_iota(jnp.int32, (S, S), 0)
    col = jax.lax.broadcasted_iota(jnp.int32, (S, S), 1)
    causal = col <= row

    # ---- GQA attention: per-head softmax, ONE packed o_proj at the end ----
    head_outs = []
    for hh in range(N_HEADS):
        kv = hh // GROUPS
        qh = q[:, hh * HEAD_DIM:(hh + 1) * HEAD_DIM]
        kh = k[:, kv * HEAD_DIM:(kv + 1) * HEAD_DIM]
        vh = v[:, kv * HEAD_DIM:(kv + 1) * HEAD_DIM]
        scores = jnp.dot(qh, kh.T, preferred_element_type=jnp.float32) * SCALING
        scores = jnp.where(causal, scores, -1e30)           # finite -> NaN-safe
        m = jnp.max(scores, axis=-1, keepdims=True)
        p = jnp.exp(scores - m)
        p = p * pl.reciprocal(jnp.sum(p, axis=-1, keepdims=True), approx=True)
        head_outs.append(jnp.dot(p, vh, preferred_element_type=jnp.float32))
    attn = jnp.concatenate(head_outs, axis=-1)              # (S, Q_DIM)
    attn_out = jnp.dot(attn.astype(PARAM_DT), wo_ref[0],
                       preferred_element_type=jnp.float32)  # (S, H)

    h1 = h + attn_out

    # ---- post-attention RMSNorm + fused SwiGLU MLP ----
    var2 = jnp.mean(h1 * h1, axis=-1, keepdims=True)
    normed2 = (h1 * jax.lax.rsqrt(var2 + EPS)) * ln2_ref[0]
    gu = jnp.dot(normed2.astype(PARAM_DT), wgu_ref[0],
                 preferred_element_type=jnp.float32)        # (S, 2*INTER)
    gate = gu[:, :INTER]
    up = gu[:, INTER:]
    act = (gate * jax.nn.sigmoid(gate)) * up
    mlp_out = jnp.dot(act.astype(PARAM_DT), wd_ref[0],
                      preferred_element_type=jnp.float32)   # (S, H)

    h_new = h1 + mlp_out
    h_ref[...] = h_new                                      # carry to next layer

    # ---- final model RMSNorm fused into the last grid step ----
    @pl.when(l == pl.num_programs(0) - 1)
    def _():
        varf = jnp.mean(h_new * h_new, axis=-1, keepdims=True)
        out_ref[...] = (h_new * jax.lax.rsqrt(varf + EPS)) * fln_ref[...]


# ----------------------------------------------------------------------------
# Model wrapper (plain JAX glue around the single Pallas call)
# ----------------------------------------------------------------------------
@partial(jax.jit, static_argnames=("start_pos",))
def llama_forward(input_ids, position_ids, params, start_pos=0):
    # TODO(synk): start_pos / KV-cache writeback elided; start_pos=0 prefill is
    # numerically identical to the cached path in the reference module.
    del start_pos
    seqlen = position_ids.shape[1]
    x = jnp.take(params["embed"], input_ids[0], axis=0)      # (S, H) f32
    cos, sin = rotary_cos_sin(position_ids, config)          # (S, head_dim)

    # cos/sin tiled per head across the packed qkv columns; v columns pass through.
    cos_full = jnp.concatenate(
        [jnp.tile(cos, (1, N_HEADS)), jnp.tile(cos, (1, N_KV)),
         jnp.ones((seqlen, KV_DIM), jnp.float32)], axis=-1)   # (S, QKV_DIM)
    sin_full = jnp.concatenate(
        [jnp.tile(sin, (1, N_HEADS)), jnp.tile(sin, (1, N_KV)),
         jnp.zeros((seqlen, KV_DIM), jnp.float32)], axis=-1)

    args = (x, cos_full, sin_full, ROT_MAT,
            params["ln1"], params["wqkv"], params["wo"],
            params["ln2"], params["wgu"], params["wd"], params["final_ln"])

    layer_w = lambda l: (l, 0, 0)     # per-layer stacked weights (streamed over l)
    const2 = lambda l: (0, 0)         # layer-invariant blocks (fetched once)

    out = pl.pallas_call(
        fused_llama_kernel,
        out_shape=jax.ShapeDtypeStruct((seqlen, HID), jnp.float32),
        grid_spec=pltpu.PrefetchScalarGridSpec(
            num_scalar_prefetch=0,
            grid=(N_LAYERS,),
            in_specs=[
                pl.BlockSpec((seqlen, HID), const2),           # x (embeddings)
                pl.BlockSpec((seqlen, QKV_DIM), const2),       # cos (packed)
                pl.BlockSpec((seqlen, QKV_DIM), const2),       # sin (packed)
                pl.BlockSpec((QKV_DIM, QKV_DIM), const2),      # rotate_half matrix
                pl.BlockSpec((1, 1, HID), layer_w),            # ln1
                pl.BlockSpec((1, HID, QKV_DIM), layer_w),      # wqkv
                pl.BlockSpec((1, Q_DIM, HID), layer_w),        # wo
                pl.BlockSpec((1, 1, HID), layer_w),            # ln2
                pl.BlockSpec((1, HID, GU_DIM), layer_w),       # wgu
                pl.BlockSpec((1, INTER, HID), layer_w),        # wd
                pl.BlockSpec((1, HID), const2),                # final norm weight
            ],
            out_specs=pl.BlockSpec((seqlen, HID), const2),     # resident output
            scratch_shapes=[pltpu.VMEM((seqlen, HID), jnp.float32)],  # residual
        ),
        compiler_params=pltpu.CompilerParams(
            dimension_semantics=("arbitrary",)),               # layer axis is sequential
    )(*args)
    return out[None, :, :]                                     # (1, S, H)


# ----------------------------------------------------------------------------
# Parameter init (weights stored (in_features, out_features), stacked over layers)
# ----------------------------------------------------------------------------
def init_params(key):
    def uinit(k, shape, fan_in):
        bound = 1.0 / math.sqrt(fan_in)
        return jax.random.uniform(k, shape, jnp.float32, -bound, bound)

    keys = jax.random.split(key, 5)
    params = dict(
        embed=jax.random.normal(keys[0], (config["vocab_size"], HID), jnp.float32),
        final_ln=jnp.ones((1, HID), jnp.float32),
        ln1=jnp.ones((N_LAYERS, 1, HID), jnp.float32),
        ln2=jnp.ones((N_LAYERS, 1, HID), jnp.float32),
        # bf16 weights: halves HBM->VMEM traffic and feeds the MXU bf16 path.
        wqkv=uinit(keys[1], (N_LAYERS, HID, QKV_DIM), HID).astype(PARAM_DT),
        wo=uinit(keys[2], (N_LAYERS, Q_DIM, HID), Q_DIM).astype(PARAM_DT),
        wgu=uinit(keys[3], (N_LAYERS, HID, GU_DIM), HID).astype(PARAM_DT),
        wd=uinit(keys[4], (N_LAYERS, INTER, HID), INTER).astype(PARAM_DT),
    )
    return params


if __name__ == "__main__":
    key = jax.random.PRNGKey(0)
    pkey, ikey = jax.random.split(key)
    params = init_params(pkey)

    seqlen = 8
    input_ids = jax.random.randint(ikey, (1, seqlen), 0, config["vocab_size"], jnp.int32)
    position_ids = jnp.arange(seqlen, dtype=jnp.int32)[None, :]

    out = llama_forward(input_ids, position_ids, params, start_pos=0)
    out = jax.block_until_ready(out)
    assert out.shape == (1, seqlen, HID)
    assert bool(jnp.all(jnp.isfinite(out)))
    print("KERNEL_OK")
</pallas_src>

<mosaic_0001>
module attributes {stable_mosaic.version = 11 : i64} {
  func.func @fused_llama_kernel(%arg0: i32, %arg1: memref<8x64xf32, #tpu.memory_space<vmem>>, %arg2: memref<8x128xf32, #tpu.memory_space<vmem>>, %arg3: memref<8x128xf32, #tpu.memory_space<vmem>>, %arg4: memref<128x128xf32, #tpu.memory_space<vmem>>, %arg5: memref<1x1x64xf32, #tpu.memory_space<vmem>>, %arg6: memref<1x64x128xbf16, #tpu.memory_space<vmem>>, %arg7: memref<1x64x64xbf16, #tpu.memory_space<vmem>>, %arg8: memref<1x1x64xf32, #tpu.memory_space<vmem>>, %arg9: memref<1x64x256xbf16, #tpu.memory_space<vmem>>, %arg10: memref<1x128x64xbf16, #tpu.memory_space<vmem>>, %arg11: memref<1x64xf32, #tpu.memory_space<vmem>>, %arg12: memref<8x64xf32, #tpu.memory_space<vmem>>, %arg13: memref<8x64xf32, #tpu.memory_space<vmem>>) attributes {dimension_semantics = [#tpu.dimension_semantics<arbitrary>], iteration_bounds = array<i64: 2>, scalar_prefetch = 0 : i64, scratch_operands = 1 : i64, tpu.core_type = #tpu.core_type<tc>, window_params = [{pipeline_mode = #tpu.pipeline_mode<synchronous>, transform_indices = @transform_0, window_bounds = array<i64: 8, 64>}, {pipeline_mode = #tpu.pipeline_mode<synchronous>, transform_indices = @transform_1, window_bounds = array<i64: 8, 128>}, {pipeline_mode = #tpu.pipeline_mode<synchronous>, transform_indices = @transform_2, window_bounds = array<i64: 8, 128>}, {pipeline_mode = #tpu.pipeline_mode<synchronous>, transform_indices = @transform_3, window_bounds = array<i64: 128, 128>}, {transform_indices = @transform_4, window_bounds = array<i64: 1, 1, 64>}, {transform_indices = @transform_5, window_bounds = array<i64: 1, 64, 128>}, {transform_indices = @transform_6, window_bounds = array<i64: 1, 64, 64>}, {transform_indices = @transform_7, window_bounds = array<i64: 1, 1, 64>}, {transform_indices = @transform_8, window_bounds = array<i64: 1, 64, 256>}, {transform_indices = @transform_9, window_bounds = array<i64: 1, 128, 64>}, {pipeline_mode = #tpu.pipeline_mode<synchronous>, transform_indices = @transform_10, window_bounds = array<i64: 1, 64>}, {pipeline_mode = #tpu.pipeline_mode<synchronous>, transform_indices = @transform_11, window_bounds = array<i64: 8, 64>}]} {
    %c0_i32 = arith.constant 0 : i32
    %0 = arith.cmpi eq, %arg0, %c0_i32 : i32
    %1 = arith.extui %0 : i1 to i32
    %c0_i32_0 = arith.constant 0 : i32
    %2 = arith.cmpi ne, %1, %c0_i32_0 : i32
    scf.if %2 {
      %c0_64 = arith.constant 0 : index
      %c0_65 = arith.constant 0 : index
      %157 = vector.load %arg1[%c0_64, %c0_65] : memref<8x64xf32, #tpu.memory_space<vmem>>, vector<8x64xf32>
      %c0_66 = arith.constant 0 : index
      %c0_67 = arith.constant 0 : index
      %158 = vector.load %arg13[%c0_66, %c0_67] : memref<8x64xf32, #tpu.memory_space<vmem>>, vector<8x64xf32>
      tpu.vector_store %arg13[%c0_66, %c0_67], %157 {strides = array<i32>} : memref<8x64xf32, #tpu.memory_space<vmem>>, vector<8x64xf32>,
    } else {
    }
    %c0 = arith.constant 0 : index
    %c0_1 = arith.constant 0 : index
    %3 = vector.load %arg13[%c0, %c0_1] : memref<8x64xf32, #tpu.memory_space<vmem>>, vector<8x64xf32>
    %4 = arith.mulf %3, %3 : vector<8x64xf32>
    %cst = arith.constant dense<0.000000e+00> : vector<8xf32>
    %5 = vector.multi_reduction <add>, %4, %cst [1] : vector<8x64xf32> to vector<8xf32>
    %6 = vector.shape_cast %5 : vector<8xf32> to vector<8x1xf32>
    %cst_2 = arith.constant 6.400000e+01 : f32
    %7 = vector.broadcast %cst_2 : f32 to vector<8x1xf32>
    %8 = arith.divf %6, %7 : vector<8x1xf32>
    %cst_3 = arith.constant 9.99999997E-7 : f32
    %9 = vector.broadcast %cst_3 : f32 to vector<8x1xf32>
    %10 = arith.addf %8, %9 : vector<8x1xf32>
    %11 = math.rsqrt %10 : vector<8x1xf32>
    %12 = vector.broadcast %11 : vector<8x1xf32> to vector<8x64xf32>
    %13 = arith.mulf %3, %12 : vector<8x64xf32>
    %c0_4 = arith.constant 0 : index
    %c0_5 = arith.constant 0 : index
    %c0_6 = arith.constant 0 : index
    %14 = vector.load %arg5[%c0_4, %c0_5, %c0_6] : memref<1x1x64xf32, #tpu.memory_space<vmem>>, vector<1x1x64xf32>
    %15 = vector.shape_cast %14 : vector<1x1x64xf32> to vector<1x64xf32>
    %16 = vector.broadcast %15 : vector<1x64xf32> to vector<8x64xf32>
    %17 = arith.mulf %13, %16 : vector<8x64xf32>
    %18 = arith.truncf %17 : vector<8x64xf32> to vector<8x64xbf16>
    %c0_7 = arith.constant 0 : index
    %c0_8 = arith.constant 0 : index
    %c0_9 = arith.constant 0 : index
    %19 = vector.load %arg6[%c0_7, %c0_8, %c0_9] : memref<1x64x128xbf16, #tpu.memory_space<vmem>>, vector<1x64x128xbf16>
    %20 = vector.shape_cast %19 : vector<1x64x128xbf16> to vector<64x128xbf16>
    %cst_10 = arith.constant dense<0.000000e+00> : vector<8x128xf32>
    %21 = tpu.matmul %18, %20, %cst_10 {dimension_numbers = #tpu.dot_dimension_numbers<[1], [0], [0], [1], [0, 0, 1, 1], [], []>} : vector<8x64xbf16>, vector<64x128xbf16>, vector<8x128xf32> -> vector<8x128xf32>
    %c0_11 = arith.constant 0 : index
    %c0_12 = arith.constant 0 : index
    %22 = vector.load %arg4[%c0_11, %c0_12] : memref<128x128xf32, #tpu.memory_space<vmem>>, vector<128x128xf32>
    %cst_13 = arith.constant dense<0.000000e+00> : vector<8x128xf32>
    %23 = tpu.matmul %21, %22, %cst_13 {dimension_numbers = #tpu.dot_dimension_numbers<[1], [0], [0], [1], [0, 0, 1, 1], [], []>} : vector<8x128xf32>, vector<128x128xf32>, vector<8x128xf32> -> vector<8x128xf32>
    %c0_14 = arith.constant 0 : index
    %c0_15 = arith.constant 0 : index
    %24 = vector.load %arg2[%c0_14, %c0_15] : memref<8x128xf32, #tpu.memory_space<vmem>>, vector<8x128xf32>
    %25 = arith.mulf %21, %24 : vector<8x128xf32>
    %c0_16 = arith.constant 0 : index
    %c0_17 = arith.constant 0 : index
    %26 = vector.load %arg3[%c0_16, %c0_17] : memref<8x128xf32, #tpu.memory_space<vmem>>, vector<8x128xf32>
    %27 = arith.mulf %23, %26 : vector<8x128xf32>
    %28 = arith.addf %25, %27 : vector<8x128xf32>
    %29 = vector.extract_strided_slice %28 {offsets = [0, 0], sizes = [8, 64], strides = [1, 1]} : vector<8x128xf32> to vector<8x64xf32>
    %30 = vector.extract_strided_slice %28 {offsets = [0, 64], sizes = [8, 32], strides = [1, 1]} : vector<8x128xf32> to vector<8x32xf32>
    %31 = vector.extract_strided_slice %28 {offsets = [0, 96], sizes = [8, 32], strides = [1, 1]} : vector<8x128xf32> to vector<8x32xf32>
    %32 = tpu.iota {dimensions = array<i32: 0>} : vector<8x8xi32>
    %33 = tpu.iota {dimensions = array<i32: 1>} : vector<8x8xi32>
    %34 = arith.cmpi sle, %33, %32 : vector<8x8xi32>
    %35 = vector.extract_strided_slice %29 {offsets = [0, 0], sizes = [8, 16], strides = [1, 1]} : vector<8x64xf32> to vector<8x16xf32>
    %36 = vector.extract_strided_slice %30 {offsets = [0, 0], sizes = [8, 16], strides = [1, 1]} : vector<8x32xf32> to vector<8x16xf32>
    %37 = vector.extract_strided_slice %31 {offsets = [0, 0], sizes = [8, 16], strides = [1, 1]} : vector<8x32xf32> to vector<8x16xf32>
    %38 = tpu.transpose %36, [1, 0] : vector<8x16xf32> -> vector<16x8xf32>
    %cst_18 = arith.constant dense<0.000000e+00> : vector<8x8xf32>
    %39 = tpu.matmul %35, %38, %cst_18 {dimension_numbers = #tpu.dot_dimension_numbers<[1], [0], [0], [1], [0, 0, 1, 1], [], []>} : vector<8x16xf32>, vector<16x8xf32>, vector<8x8xf32> -> vector<8x8xf32>
    %cst_19 = arith.constant 2.500000e-01 : f32
    %40 = vector.broadcast %cst_19 : f32 to vector<8x8xf32>
    %41 = arith.mulf %39, %40 : vector<8x8xf32>
    %cst_20 = arith.constant -1.000000e+30 : f32
    %42 = vector.broadcast %cst_20 : f32 to vector<8x8xf32>
    %43 = arith.select %34, %41, %42 : vector<8x8xi1>, vector<8x8xf32>
    %cst_21 = arith.constant dense<0xFF800000> : vector<8xf32>
    %44 = vector.multi_reduction <maximumf>, %43, %cst_21 [1] : vector<8x8xf32> to vector<8xf32>
    %45 = vector.shape_cast %44 : vector<8xf32> to vector<8x1xf32>
    %46 = vector.broadcast %45 : vector<8x1xf32> to vector<8x8xf32>
    %47 = arith.subf %43, %46 : vector<8x8xf32>
    %48 = math.exp %47 : vector<8x8xf32>
    %cst_22 = arith.constant dense<0.000000e+00> : vector<8xf32>
    %49 = vector.multi_reduction <add>, %48, %cst_22 [1] : vector<8x8xf32> to vector<8xf32>
    %50 = vector.shape_cast %49 : vector<8xf32> to vector<8x1xf32>
    %51 = tpu.reciprocal %50 {approx = true} : vector<8x1xf32> -> vector<8x1xf32>
    %52 = vector.broadcast %51 : vector<8x1xf32> to vector<8x8xf32>
    %53 = arith.mulf %48, %52 : vector<8x8xf32>
    %cst_23 = arith.constant dense<0.000000e+00> : vector<8x16xf32>
    %54 = tpu.matmul %53, %37, %cst_23 {dimension_numbers = #tpu.dot_dimension_numbers<[1], [0], [0], [1], [0, 0, 1, 1], [], []>} : vector<8x8xf32>, vector<8x16xf32>, vector<8x16xf32> -> vector<8x16xf32>
    %55 = vector.extract_strided_slice %29 {offsets = [0, 16], sizes = [8, 16], strides = [1, 1]} : vector<8x64xf32> to vector<8x16xf32>
    %56 = vector.extract_strided_slice %30 {offsets = [0, 0], sizes = [8, 16], strides = [1, 1]} : vector<8x32xf32> to vector<8x16xf32>
    %57 = vector.extract_strided_slice %31 {offsets = [0, 0], sizes = [8, 16], strides = [1, 1]} : vector<8x32xf32> to vector<8x16xf32>
    %58 = tpu.transpose %56, [1, 0] : vector<8x16xf32> -> vector<16x8xf32>
    %cst_24 = arith.constant dense<0.000000e+00> : vector<8x8xf32>
    %59 = tpu.matmul %55, %58, %cst_24 {dimension_numbers = #tpu.dot_dimension_numbers<[1], [0], [0], [1], [0, 0, 1, 1], [], []>} : vector<8x16xf32>, vector<16x8xf32>, vector<8x8xf32> -> vector<8x8xf32>
    %cst_25 = arith.constant 2.500000e-01 : f32
    %60 = vector.broadcast %cst_25 : f32 to vector<8x8xf32>
    %61 = arith.mulf %59, %60 : vector<8x8xf32>
    %cst_26 = arith.constant -1.000000e+30 : f32
    %62 = vector.broadcast %cst_26 : f32 to vector<8x8xf32>
    %63 = arith.select %34, %61, %62 : vector<8x8xi1>, vector<8x8xf32>
    %cst_27 = arith.constant dense<0xFF800000> : vector<8xf32>
    %64 = vector.multi_reduction <maximumf>, %63, %cst_27 [1] : vector<8x8xf32> to vector<8xf32>
    %65 = vector.shape_cast %64 : vector<8xf32> to vector<8x1xf32>
    %66 = vector.broadcast %65 : vector<8x1xf32> to vector<8x8xf32>
    %67 = arith.subf %63, %66 : vector<8x8xf32>
    %68 = math.exp %67 : vector<8x8xf32>
    %cst_28 = arith.constant dense<0.000000e+00> : vector<8xf32>
    %69 = vector.multi_reduction <add>, %68, %cst_28 [1] : vector<8x8xf32> to vector<8xf32>
    %70 = vector.shape_cast %69 : vector<8xf32> to vector<8x1xf32>
    %71 = tpu.reciprocal %70 {approx = true} : vector<8x1xf32> -> vector<8x1xf32>
    %72 = vector.broadcast %71 : vector<8x1xf32> to vector<8x8xf32>
    %73 = arith.mulf %68, %72 : vector<8x8xf32>
    %cst_29 = arith.constant dense<0.000000e+00> : vector<8x16xf32>
    %74 = tpu.matmul %73, %57, %cst_29 {dimension_numbers = #tpu.dot_dimension_numbers<[1], [0], [0], [1], [0, 0, 1, 1], [], []>} : vector<8x8xf32>, vector<8x16xf32>, vector<8x16xf32> -> vector<8x16xf32>
    %75 = vector.extract_strided_slice %29 {offsets = [0, 32], sizes = [8, 16], strides = [1, 1]} : vector<8x64xf32> to vector<8x16xf32>
    %76 = vector.extract_strided_slice %30 {offsets = [0, 16], sizes = [8, 16], strides = [1, 1]} : vector<8x32xf32> to vector<8x16xf32>
    %77 = vector.extract_strided_slice %31 {offsets = [0, 16], sizes = [8, 16], strides = [1, 1]} : vector<8x32xf32> to vector<8x16xf32>
    %78 = tpu.transpose %76, [1, 0] : vector<8x16xf32> -> vector<16x8xf32>
    %cst_30 = arith.constant dense<0.000000e+00> : vector<8x8xf32>
    %79 = tpu.matmul %75, %78, %cst_30 {dimension_numbers = #tpu.dot_dimension_numbers<[1], [0], [0], [1], [0, 0, 1, 1], [], []>} : vector<8x16xf32>, vector<16x8xf32>, vector<8x8xf32> -> vector<8x8xf32>
    %cst_31 = arith.constant 2.500000e-01 : f32
    %80 = vector.broadcast %cst_31 : f32 to vector<8x8xf32>
    %81 = arith.mulf %79, %80 : vector<8x8xf32>
    %cst_32 = arith.constant -1.000000e+30 : f32
    %82 = vector.broadcast %cst_32 : f32 to vector<8x8xf32>
    %83 = arith.select %34, %81, %82 : vector<8x8xi1>, vector<8x8xf32>
    %cst_33 = arith.constant dense<0xFF800000> : vector<8xf32>
    %84 = vector.multi_reduction <maximumf>, %83, %cst_33 [1] : vector<8x8xf32> to vector<8xf32>
    %85 = vector.shape_cast %84 : vector<8xf32> to vector<8x1xf32>
    %86 = vector.broadcast %85 : vector<8x1xf32> to vector<8x8xf32>
    %87 = arith.subf %83, %86 : vector<8x8xf32>
    %88 = math.exp %87 : vector<8x8xf32>
    %cst_34 = arith.constant dense<0.000000e+00> : vector<8xf32>
    %89 = vector.multi_reduction <add>, %88, %cst_34 [1] : vector<8x8xf32> to vector<8xf32>
    %90 = vector.shape_cast %89 : vector<8xf32> to vector<8x1xf32>
    %91 = tpu.reciprocal %90 {approx = true} : vector<8x1xf32> -> vector<8x1xf32>
    %92 = vector.broadcast %91 : vector<8x1xf32> to vector<8x8xf32>
    %93 = arith.mulf %88, %92 : vector<8x8xf32>
    %cst_35 = arith.constant dense<0.000000e+00> : vector<8x16xf32>
    %94 = tpu.matmul %93, %77, %cst_35 {dimension_numbers = #tpu.dot_dimension_numbers<[1], [0], [0], [1], [0, 0, 1, 1], [], []>} : vector<8x8xf32>, vector<8x16xf32>, vector<8x16xf32> -> vector<8x16xf32>
    %95 = vector.extract_strided_slice %29 {offsets = [0, 48], sizes = [8, 16], strides = [1, 1]} : vector<8x64xf32> to vector<8x16xf32>
    %96 = vector.extract_strided_slice %30 {offsets = [0, 16], sizes = [8, 16], strides = [1, 1]} : vector<8x32xf32> to vector<8x16xf32>
    %97 = vector.extract_strided_slice %31 {offsets = [0, 16], sizes = [8, 16], strides = [1, 1]} : vector<8x32xf32> to vector<8x16xf32>
    %98 = tpu.transpose %96, [1, 0] : vector<8x16xf32> -> vector<16x8xf32>
    %cst_36 = arith.constant dense<0.000000e+00> : vector<8x8xf32>
    %99 = tpu.matmul %95, %98, %cst_36 {dimension_numbers = #tpu.dot_dimension_numbers<[1], [0], [0], [1], [0, 0, 1, 1], [], []>} : vector<8x16xf32>, vector<16x8xf32>, vector<8x8xf32> -> vector<8x8xf32>
    %cst_37 = arith.constant 2.500000e-01 : f32
    %100 = vector.broadcast %cst_37 : f32 to vector<8x8xf32>
    %101 = arith.mulf %99, %100 : vector<8x8xf32>
    %cst_38 = arith.constant -1.000000e+30 : f32
    %102 = vector.broadcast %cst_38 : f32 to vector<8x8xf32>
    %103 = arith.select %34, %101, %102 : vector<8x8xi1>, vector<8x8xf32>
    %cst_39 = arith.constant dense<0xFF800000> : vector<8xf32>
    %104 = vector.multi_reduction <maximumf>, %103, %cst_39 [1] : vector<8x8xf32> to vector<8xf32>
    %105 = vector.shape_cast %104 : vector<8xf32> to vector<8x1xf32>
    %106 = vector.broadcast %105 : vector<8x1xf32> to vector<8x8xf32>
    %107 = arith.subf %103, %106 : vector<8x8xf32>
    %108 = math.exp %107 : vector<8x8xf32>
    %cst_40 = arith.constant dense<0.000000e+00> : vector<8xf32>
    %109 = vector.multi_reduction <add>, %108, %cst_40 [1] : vector<8x8xf32> to vector<8xf32>
    %110 = vector.shape_cast %109 : vector<8xf32> to vector<8x1xf32>
    %111 = tpu.reciprocal %110 {approx = true} : vector<8x1xf32> -> vector<8x1xf32>
    %112 = vector.broadcast %111 : vector<8x1xf32> to vector<8x8xf32>
    %113 = arith.mulf %108, %112 : vector<8x8xf32>
    %cst_41 = arith.constant dense<0.000000e+00> : vector<8x16xf32>
    %114 = tpu.matmul %113, %97, %cst_41 {dimension_numbers = #tpu.dot_dimension_numbers<[1], [0], [0], [1], [0, 0, 1, 1], [], []>} : vector<8x8xf32>, vector<8x16xf32>, vector<8x16xf32> -> vector<8x16xf32>
    %115 = tpu.concatenate %54, %74, %94, %114 in 1 : vector<8x16xf32>, vector<8x16xf32>, vector<8x16xf32>, vector<8x16xf32> -> vector<8x64xf32>
    %116 = arith.truncf %115 : vector<8x64xf32> to vector<8x64xbf16>
    %c0_42 = arith.constant 0 : index
    %c0_43 = arith.constant 0 : index
    %c0_44 = arith.constant 0 : index
    %117 = vector.load %arg7[%c0_42, %c0_43, %c0_44] : memref<1x64x64xbf16, #tpu.memory_space<vmem>>, vector<1x64x64xbf16>
    %118 = vector.shape_cast %117 : vector<1x64x64xbf16> to vector<64x64xbf16>
    %cst_45 = arith.constant dense<0.000000e+00> : vector<8x64xf32>
    %119 = tpu.matmul %116, %118, %cst_45 {dimension_numbers = #tpu.dot_dimension_numbers<[1], [0], [0], [1], [0, 0, 1, 1], [], []>} : vector<8x64xbf16>, vector<64x64xbf16>, vector<8x64xf32> -> vector<8x64xf32>
    %120 = arith.addf %3, %119 : vector<8x64xf32>
    %121 = arith.mulf %120, %120 : vector<8x64xf32>
    %cst_46 = arith.constant dense<0.000000e+00> : vector<8xf32>
    %122 = vector.multi_reduction <add>, %121, %cst_46 [1] : vector<8x64xf32> to vector<8xf32>
    %123 = vector.shape_cast %122 : vector<8xf32> to vector<8x1xf32>
    %cst_47 = arith.constant 6.400000e+01 : f32
    %124 = vector.broadcast %cst_47 : f32 to vector<8x1xf32>
    %125 = arith.divf %123, %124 : vector<8x1xf32>
    %cst_48 = arith.constant 9.99999997E-7 : f32
    %126 = vector.broadcast %cst_48 : f32 to vector<8x1xf32>
    %127 = arith.addf %125, %126 : vector<8x1xf32>
    %128 = math.rsqrt %127 : vector<8x1xf32>
    %129 = vector.broadcast %128 : vector<8x1xf32> to vector<8x64xf32>
    %130 = arith.mulf %120, %129 : vector<8x64xf32>
    %c0_49 = arith.constant 0 : index
    %c0_50 = arith.constant 0 : index
    %c0_51 = arith.constant 0 : index
    %131 = vector.load %arg8[%c0_49, %c0_50, %c0_51] : memref<1x1x64xf32, #tpu.memory_space<vmem>>, vector<1x1x64xf32>
    %132 = vector.shape_cast %131 : vector<1x1x64xf32> to vector<1x64xf32>
    %133 = vector.broadcast %132 : vector<1x64xf32> to vector<8x64xf32>
    %134 = arith.mulf %130, %133 : vector<8x64xf32>
    %135 = arith.truncf %134 : vector<8x64xf32> to vector<8x64xbf16>
    %c0_52 = arith.constant 0 : index
    %c0_53 = arith.constant 0 : index
    %c0_54 = arith.constant 0 : index
    %136 = vector.load %arg9[%c0_52, %c0_53, %c0_54] : memref<1x64x256xbf16, #tpu.memory_space<vmem>>, vector<1x64x256xbf16>
    %137 = vector.shape_cast %136 : vector<1x64x256xbf16> to vector<64x256xbf16>
    %cst_55 = arith.constant dense<0.000000e+00> : vector<8x256xf32>
    %138 = tpu.matmul %135, %137, %cst_55 {dimension_numbers = #tpu.dot_dimension_numbers<[1], [0], [0], [1], [0, 0, 1, 1], [], []>} : vector<8x64xbf16>, vector<64x256xbf16>, vector<8x256xf32> -> vector<8x256xf32>
    %139 = vector.extract_strided_slice %138 {offsets = [0, 0], sizes = [8, 128], strides = [1, 1]} : vector<8x256xf32> to vector<8x128xf32>
    %140 = vector.extract_strided_slice %138 {offsets = [0, 128], sizes = [8, 128], strides = [1, 1]} : vector<8x256xf32> to vector<8x128xf32>
    %141 = arith.negf %139 : vector<8x128xf32>
    %142 = math.exp %141 : vector<8x128xf32>
    %cst_56 = arith.constant 1.000000e+00 : f32
    %143 = vector.broadcast %cst_56 : f32 to vector<8x128xf32>
    %144 = arith.addf %143, %142 : vector<8x128xf32>
    %145 = arith.divf %143, %144 : vector<8x128xf32>
    %146 = arith.mulf %139, %145 : vector<8x128xf32>
    %147 = arith.mulf %146, %140 : vector<8x128xf32>
    %148 = arith.truncf %147 : vector<8x128xf32> to vector<8x128xbf16>
    %c0_57 = arith.constant 0 : index
    %c0_58 = arith.constant 0 : index
    %c0_59 = arith.constant 0 : index
    %149 = vector.load %arg10[%c0_57, %c0_58, %c0_59] : memref<1x128x64xbf16, #tpu.memory_space<vmem>>, vector<1x128x64xbf16>
    %150 = vector.shape_cast %149 : vector<1x128x64xbf16> to vector<128x64xbf16>
    %cst_60 = arith.constant dense<0.000000e+00> : vector<8x64xf32>
    %151 = tpu.matmul %148, %150, %cst_60 {dimension_numbers = #tpu.dot_dimension_numbers<[1], [0], [0], [1], [0, 0, 1, 1], [], []>} : vector<8x128xbf16>, vector<128x64xbf16>, vector<8x64xf32> -> vector<8x64xf32>
    %152 = arith.addf %120, %151 : vector<8x64xf32>
    %c0_61 = arith.constant 0 : index
    %c0_62 = arith.constant 0 : index
    %153 = vector.load %arg13[%c0_61, %c0_62] : memref<8x64xf32, #tpu.memory_space<vmem>>, vector<8x64xf32>
    tpu.vector_store %arg13[%c0_61, %c0_62], %152 {strides = array<i32>} : memref<8x64xf32, #tpu.memory_space<vmem>>, vector<8x64xf32>,
    %c1_i32 = arith.constant 1 : i32
    %154 = arith.cmpi eq, %arg0, %c1_i32 : i32
    %155 = arith.extui %154 : i1 to i32
    %c0_i32_63 = arith.constant 0 : i32
    %156 = arith.cmpi ne, %155, %c0_i32_63 : i32
    scf.if %156 {
      %157 = arith.mulf %152, %152 : vector<8x64xf32>
      %cst_64 = arith.constant dense<0.000000e+00> : vector<8xf32>
      %158 = vector.multi_reduction <add>, %157, %cst_64 [1] : vector<8x64xf32> to vector<8xf32>
      %159 = vector.shape_cast %158 : vector<8xf32> to vector<8x1xf32>
      %cst_65 = arith.constant 6.400000e+01 : f32
      %160 = vector.broadcast %cst_65 : f32 to vector<8x1xf32>
      %161 = arith.divf %159, %160 : vector<8x1xf32>
      %cst_66 = arith.constant 9.99999997E-7 : f32
      %162 = vector.broadcast %cst_66 : f32 to vector<8x1xf32>
      %163 = arith.addf %161, %162 : vector<8x1xf32>
      %164 = math.rsqrt %163 : vector<8x1xf32>
      %165 = vector.broadcast %164 : vector<8x1xf32> to vector<8x64xf32>
      %166 = arith.mulf %152, %165 : vector<8x64xf32>
      %c0_67 = arith.constant 0 : index
      %c0_68 = arith.constant 0 : index
      %167 = vector.load %arg11[%c0_67, %c0_68] : memref<1x64xf32, #tpu.memory_space<vmem>>, vector<1x64xf32>
      %168 = vector.broadcast %167 : vector<1x64xf32> to vector<8x64xf32>
      %169 = arith.mulf %166, %168 : vector<8x64xf32>
      %c0_69 = arith.constant 0 : index
      %c0_70 = arith.constant 0 : index
      %170 = vector.load %arg12[%c0_69, %c0_70] : memref<8x64xf32, #tpu.memory_space<vmem>>, vector<8x64xf32>
      tpu.vector_store %arg12[%c0_69, %c0_70], %169 {strides = array<i32>} : memref<8x64xf32, #tpu.memory_space<vmem>>, vector<8x64xf32>,
    } else {
    }
    return
  }
  func.func @transform_0(%arg0: i32) -> (i32, i32) {
    %c0_i32 = arith.constant 0 : i32
    %c0_i32_0 = arith.constant 0 : i32
    %c0_i32_1 = arith.constant 0 : i32
    return %c0_i32, %c0_i32_0 : i32, i32
  }
  func.func @transform_1(%arg0: i32) -> (i32, i32) {
    %c0_i32 = arith.constant 0 : i32
    %c0_i32_0 = arith.constant 0 : i32
    %c0_i32_1 = arith.constant 0 : i32
    return %c0_i32, %c0_i32_0 : i32, i32
  }
  func.func @transform_2(%arg0: i32) -> (i32, i32) {
    %c0_i32 = arith.constant 0 : i32
    %c0_i32_0 = arith.constant 0 : i32
    %c0_i32_1 = arith.constant 0 : i32
    return %c0_i32, %c0_i32_0 : i32, i32
  }
  func.func @transform_3(%arg0: i32) -> (i32, i32) {
    %c0_i32 = arith.constant 0 : i32
    %c0_i32_0 = arith.constant 0 : i32
    %c0_i32_1 = arith.constant 0 : i32
    return %c0_i32, %c0_i32_0 : i32, i32
  }
  func.func @transform_4(%arg0: i32) -> (i32, i32, i32) {
    %c0_i32 = arith.constant 0 : i32
    %c0_i32_0 = arith.constant 0 : i32
    %c0_i32_1 = arith.constant 0 : i32
    return %arg0, %c0_i32, %c0_i32_0 : i32, i32, i32
  }
  func.func @transform_5(%arg0: i32) -> (i32, i32, i32) {
    %c0_i32 = arith.constant 0 : i32
    %c0_i32_0 = arith.constant 0 : i32
    %c0_i32_1 = arith.constant 0 : i32
    return %arg0, %c0_i32, %c0_i32_0 : i32, i32, i32
  }
  func.func @transform_6(%arg0: i32) -> (i32, i32, i32) {
    %c0_i32 = arith.constant 0 : i32
    %c0_i32_0 = arith.constant 0 : i32
    %c0_i32_1 = arith.constant 0 : i32
    return %arg0, %c0_i32, %c0_i32_0 : i32, i32, i32
  }
  func.func @transform_7(%arg0: i32) -> (i32, i32, i32) {
    %c0_i32 = arith.constant 0 : i32
    %c0_i32_0 = arith.constant 0 : i32
    %c0_i32_1 = arith.constant 0 : i32
    return %arg0, %c0_i32, %c0_i32_0 : i32, i32, i32
  }
  func.func @transform_8(%arg0: i32) -> (i32, i32, i32) {
    %c0_i32 = arith.constant 0 : i32
    %c0_i32_0 = arith.constant 0 : i32
    %c0_i32_1 = arith.constant 0 : i32
    return %arg0, %c0_i32, %c0_i32_0 : i32, i32, i32
  }
  func.func @transform_9(%arg0: i32) -> (i32, i32, i32) {
    %c0_i32 = arith.constant 0 : i32
    %c0_i32_0 = arith.constant 0 : i32
    %c0_i32_1 = arith.constant 0 : i32
    return %arg0, %c0_i32, %c0_i32_0 : i32, i32, i32
  }
  func.func @transform_10(%arg0: i32) -> (i32, i32) {
    %c0_i32 = arith.constant 0 : i32
    %c0_i32_0 = arith.constant 0 : i32
    %c0_i32_1 = arith.constant 0 : i32
    return %c0_i32, %c0_i32_0 : i32, i32
  }
  func.func @transform_11(%arg0: i32) -> (i32, i32) {
    %c0_i32 = arith.constant 0 : i32
    %c0_i32_0 = arith.constant 0 : i32
    %c0_i32_1 = arith.constant 0 : i32
    return %c0_i32, %c0_i32_0 : i32, i32
  }
}

</mosaic_0001>

<llo_original>
// kernel: tile.24
$region0: #{tile.24}
  %s0 = inlined_call_operand.vmem [shape: f32[8,4,16], index: 0, kind: input, shape index: {}]
  %s1 = inlined_call_operand.vmem [shape: f32[8,64], index: 1, kind: output, shape index: {}]
  $region1: #{tile.24} parent=0
    #allocation0 [shape = 'u8[32768]{0}', space=vmem, size = 0x8000, scoped, tag = 'scoped mem for input reshape']
    %s3 = sshllo.u32 0, 4
    %s4 = smul.addr 4, 7
    %s5 = scalar_lea.vmem %s0, %s4
    %v6 = vld [vmem:[%s5] sm:%s3]
    %s7 = scalar_lea.vmem [#allocation0], 56
    %8 = vst [vmem:[%s7] sm:%s3] %v6
    %s9 = smul.addr 4, 6
    %s10 = scalar_lea.vmem %s0, %s9
    %v11 = vld [vmem:[%s10] sm:%s3]
    %s12 = scalar_lea.vmem [#allocation0], 48
    %13 = vst [vmem:[%s12] sm:%s3] %v11
    %s14 = smul.addr 4, 5
    %s15 = scalar_lea.vmem %s0, %s14
    %v16 = vld [vmem:[%s15] sm:%s3]
    %s17 = scalar_lea.vmem [#allocation0], 40
    %18 = vst [vmem:[%s17] sm:%s3] %v16
    %s19 = smul.addr 4, 4
    %s20 = scalar_lea.vmem %s0, %s19
    %v21 = vld [vmem:[%s20] sm:%s3]
    %s22 = scalar_lea.vmem [#allocation0], 32
    %23 = vst [vmem:[%s22] sm:%s3] %v21
    %s24 = smul.addr 4, 3
    %s25 = scalar_lea.vmem %s0, %s24
    %v26 = vld [vmem:[%s25] sm:%s3]
    %s27 = scalar_lea.vmem [#allocation0], 24
    %28 = vst [vmem:[%s27] sm:%s3] %v26
    %s29 = smul.addr 4, 2
    %s30 = scalar_lea.vmem %s0, %s29
    %v31 = vld [vmem:[%s30] sm:%s3]
    %s32 = scalar_lea.vmem [#allocation0], 16
    %33 = vst [vmem:[%s32] sm:%s3] %v31
    %s34 = scalar_lea.vmem %s0, 4
    %v35 = vld [vmem:[%s34] sm:%s3]
    %s36 = scalar_lea.vmem [#allocation0], 8
    %37 = vst [vmem:[%s36] sm:%s3] %v35
    %v38 = vld [vmem:[%s0] sm:%s3]
    %39 = vst [vmem:[#allocation0] sm:%s3] %v38
    %v40 = vld [vmem:[#allocation0] ss:$8 sm:$0xf]
    %v41 = vld [vmem:[#allocation0] ss:$8 sm:$0xf0]
    %vm42 = vcmask 1047556
    %v43 = vsel %vm42, %v41, %v40
    %vm44 = vcmask 130048
    %45 = vst.msk [vmem:[%s1] sm:$0xff] %vm44, %v43
    %s46 = scalar_lea.vmem [#allocation0], 3
    %v47 = vld [vmem:[%s46] ss:$8 sm:$0xf]
    %s48 = scalar_lea.vmem [#allocation0], 3
    %v49 = vld [vmem:[%s48] ss:$8 sm:$0xf0]
    %vm50 = vcmask 1047556
    %v51 = vsel %vm50, %v49, %v47
    %52 = vrot.lane.b32.xlu0 %v51, 48
    %v53 = vpop.permute.xlu0 %52
    %vm54 = vcmask 523648
    %55 = vst.msk [vmem:[%s1] sm:$0xff] %vm54, %v53
    %s56 = scalar_lea.vmem [#allocation0], 2
    %v57 = vld [vmem:[%s56] ss:$8 sm:$0xf]
    %s58 = scalar_lea.vmem [#allocation0], 2
    %v59 = vld [vmem:[%s58] ss:$8 sm:$0xf0]
    %vm60 = vcmask 1047556
    %v61 = vsel %vm60, %v59, %v57
    %62 = vrot.lane.b32.xlu0 %v61, 32
    %v63 = vpop.permute.xlu0 %62
    %vm64 = vcmask 392448
    %65 = vst.msk [vmem:[%s1] sm:$0xff] %vm64, %v63
    %s66 = scalar_lea.vmem [#allocation0], 1
    %v67 = vld [vmem:[%s66] ss:$8 sm:$0xf]
    %s68 = scalar_lea.vmem [#allocation0], 1
    %v69 = vld [vmem:[%s68] ss:$8 sm:$0xf0]
    %vm70 = vcmask 1047556
    %v71 = vsel %vm70, %v69, %v67
    %72 = vrot.lane.b32.xlu0 %v71, 16
    %v73 = vpop.permute.xlu0 %72
    %vm74 = vcmask 261248
    %75 = vst.msk [vmem:[%s1] sm:$0xff] %vm74, %v73

// kernel: tile.29
$region0: #{tile.29}
  %s0 = inlined_call_operand.vmem [shape: f32[8,2,16], index: 0, kind: input, shape index: {}]
  %s1 = inlined_call_operand.vmem [shape: f32[8,32], index: 1, kind: output, shape index: {}]
  $region1: #{tile.29} parent=0
    #allocation0 [shape = 'u8[32768]{0}', space=vmem, size = 0x8000, scoped, tag = 'scoped mem for input reshape']
    %s3 = sshllo.u32 0, 2
    %s4 = smul.addr 2, 7
    %s5 = scalar_lea.vmem %s0, %s4
    %v6 = vld [vmem:[%s5] sm:%s3]
    %s7 = scalar_lea.vmem [#allocation0], 56
    %8 = vst [vmem:[%s7] sm:%s3] %v6
    %s9 = smul.addr 2, 6
    %s10 = scalar_lea.vmem %s0, %s9
    %v11 = vld [vmem:[%s10] sm:%s3]
    %s12 = scalar_lea.vmem [#allocation0], 48
    %13 = vst [vmem:[%s12] sm:%s3] %v11
    %s14 = smul.addr 2, 5
    %s15 = scalar_lea.vmem %s0, %s14
    %v16 = vld [vmem:[%s15] sm:%s3]
    %s17 = scalar_lea.vmem [#allocation0], 40
    %18 = vst [vmem:[%s17] sm:%s3] %v16
    %s19 = smul.addr 2, 4
    %s20 = scalar_lea.vmem %s0, %s19
    %v21 = vld [vmem:[%s20] sm:%s3]
    %s22 = scalar_lea.vmem [#allocation0], 32
    %23 = vst [vmem:[%s22] sm:%s3] %v21
    %s24 = smul.addr 2, 3
    %s25 = scalar_lea.vmem %s0, %s24
    %v26 = vld [vmem:[%s25] sm:%s3]
    %s27 = scalar_lea.vmem [#allocation0], 24
    %28 = vst [vmem:[%s27] sm:%s3] %v26
    %s29 = smul.addr 2, 2
    %s30 = scalar_lea.vmem %s0, %s29
    %v31 = vld [vmem:[%s30] sm:%s3]
    %s32 = scalar_lea.vmem [#allocation0], 16
    %33 = vst [vmem:[%s32] sm:%s3] %v31
    %s34 = scalar_lea.vmem %s0, 2
    %v35 = vld [vmem:[%s34] sm:%s3]
    %s36 = scalar_lea.vmem [#allocation0], 8
    %37 = vst [vmem:[%s36] sm:%s3] %v35
    %v38 = vld [vmem:[%s0] sm:%s3]
    %39 = vst [vmem:[#allocation0] sm:%s3] %v38
    %v40 = vld [vmem:[#allocation0] ss:$8 sm:$0xf]
    %v41 = vld [vmem:[#allocation0] ss:$8 sm:$0xf0]
    %vm42 = vcmask 1047556
    %v43 = vsel %vm42, %v41, %v40
    %vm44 = vcmask 130048
    %45 = vst.msk [vmem:[%s1] sm:$0xff] %vm44, %v43
    %s46 = scalar_lea.vmem [#allocation0], 1
    %v47 = vld [vmem:[%s46] ss:$8 sm:$0xf]
    %s48 = scalar_lea.vmem [#allocation0], 1
    %v49 = vld [vmem:[%s48] ss:$8 sm:$0xf0]
    %vm50 = vcmask 1047556
    %v51 = vsel %vm50, %v49, %v47
    %52 = vrot.lane.b32.xlu0 %v51, 16
    %v53 = vpop.permute.xlu0 %52
    %vm54 = vcmask 261248
    %55 = vst.msk [vmem:[%s1] sm:$0xff] %vm54, %v53

// kernel: llama_forward.1
$region0: #{llama_forward.1}
  #allocation0 [shape = 'u32[]', space=smem, size = 0x4, offset = 0x4, fixed_abs, tag = 'smem constant byte address 0x4 - core index']
  #allocation1 [shape = 'u32[144,128]{1,0:T(1,128)}', space=vmem, size = 0x12000, scoped, tag = 'internal scratch']
  #allocation2 [shape = 'f32[8,64]{1,0:T(8,128)}', space=vmem, size = 0x1000, scoped, tag = 'scratch operand']
  %s0 = inlined_call_operand.vmem [shape: f32[8,64], index: 0, kind: input, shape index: {}]
  %s1 = inlined_call_operand.vmem [shape: f32[8,128], index: 1, kind: input, shape index: {}]
  %s2 = inlined_call_operand.vmem [shape: f32[8,128], index: 2, kind: input, shape index: {}]
  %s3 = inlined_call_operand.vmem [shape: f32[128,128], index: 3, kind: input, shape index: {}]
  %s4 = inlined_call_operand.vmem [shape: f32[2,1,64], index: 4, kind: input, shape index: {}]
  %s5 = inlined_call_operand.vmem [shape: bf16[2,64,128], index: 5, kind: input, shape index: {}]
  %s6 = inlined_call_operand.vmem [shape: bf16[2,64,64], index: 6, kind: input, shape index: {}]
  %s7 = inlined_call_operand.vmem [shape: f32[2,1,64], index: 7, kind: input, shape index: {}]
  %s8 = inlined_call_operand.vmem [shape: bf16[2,64,256], index: 8, kind: input, shape index: {}]
  %s9 = inlined_call_operand.vmem [shape: bf16[2,128,64], index: 9, kind: input, shape index: {}]
  %s10 = inlined_call_operand.vmem [shape: f32[1,64], index: 10, kind: input, shape index: {}]
  %s11 = inlined_call_operand.hbm [shape: f32[8,64], index: 11, kind: output, shape index: {}]
  %s12 = sld [smem:[#allocation0]]
  $region85: #{llama_forward.1} parent=0
    _
  %s14 = ssub.s32 1, %s12
  %s15 = scalar_select 0, %s14, %s12
  $region1: #{llama_forward.1} parent=0
    #allocation3 [shape = 'u8[4096]{0}', space=vmem, size = 0x1000, scoped, tag = 'output window, operand 0, single buffered']
    #allocation4 [shape = 's32[2]{0}', space=sflag, size = 0x8, scoped, tag = 'scoped memory for llama_forward.1']
    %16 = vsyncpa [#allocation4], 0
    loop: start=0, step=1, limit=4
    $region2: #{llama_forward.1} parent=1 // loop_pre_header
      _
    $region3: #{llama_forward.1} parent=1 // loop_header
      %s18 = sphi 0, %s22
      %p19 = scmp.ge.s32.totalorder %s18, 4
      %s26 = sphi 0, %s26
      %s28 = sphi 0, %s26
      %s29 = sphi 0, %s28
      %s43 = sphi 0, %s29
      %s47 = sphi 0, %s47
      %s49 = sphi 0, %s47
      %s50 = sphi 0, %s49
      %s64 = sphi 0, %s50
      %s68 = sphi 0, %s68
      %s70 = sphi 0, %s68
      %s71 = sphi 0, %s70
      %s85 = sphi 0, %s71
      %s89 = sphi 0, %s89
      %s91 = sphi 0, %s89
      %s92 = sphi 0, %s91
      %s106 = sphi 0, %s92
      %s112 = sphi 0, %s114
      %s115 = sphi 0, %s112
      %s116 = sphi 0, %s115
      %s132 = sphi 0, %s116
      %s138 = sphi 0, %s140
      %s141 = sphi 0, %s138
      %s142 = sphi 0, %s141
      %s158 = sphi 0, %s142
      %s164 = sphi 0, %s166
      %s167 = sphi 0, %s164
      %s168 = sphi 0, %s167
      %s184 = sphi 0, %s168
      %s190 = sphi 0, %s192
      %s193 = sphi 0, %s190
      %s194 = sphi 0, %s193
      %s210 = sphi 0, %s194
      %s216 = sphi 0, %s218
      %s219 = sphi 0, %s216
      %s220 = sphi 0, %s219
      %s236 = sphi 0, %s220
      %s242 = sphi 0, %s244
      %s245 = sphi 0, %s242
      %s246 = sphi 0, %s245
      %s262 = sphi 0, %s246
      %s266 = sphi 0, %s266
      %s268 = sphi 0, %s266
      %s269 = sphi 0, %s268
      %s283 = sphi 0, %s269
      %s287 = sphi 0, %s287
      %s289 = sphi 0, %s287
      %s290 = sphi 0, %s289
      %s304 = sphi 0, %s290
    $region4: #{llama_forward.1} parent=1 // loop_header_branch
      %21 = sbr.rel (%p19) target = $region8
    $region5: #{llama_forward.1} parent=1 // loop_body
      %s23 = ssub.s32 %s18, 1
      %s24 = ssub.s32 %s18, 2
      %s25 = sadd.s32 %s18, 1
      %s27 = sadd.s32 %s26, 1
      %p30 = scmp.eq.s32.totalorder %s18, 1
      %p31 = scmp.ne.s32.totalorder %s26, %s28
      %p32 = scmp.eq.s32.totalorder %s18, 0
      %p33 = por %p31, %p32
      %p34 = scmp.ne.s32.totalorder %s26, %s28
      %p35 = scmp.eq.s32.totalorder %s23, 1
      %p36 = por %p34, %p35
      %p37 = scmp.ne.s32.totalorder %s28, %s29
      %p38 = scmp.eq.s32.totalorder %s23, 0
      %p39 = por %p37, %p38
      %p40 = scmp.ne.s32.totalorder %s28, %s29
      %p41 = scmp.eq.s32.totalorder %s24, 1
      %p42 = por %p40, %p41
      %p44 = scmp.ne.s32.totalorder %s29, %s43
      %p45 = scmp.eq.s32.totalorder %s24, 0
      %p46 = por %p44, %p45
      %s48 = sadd.s32 %s47, 1
      %p51 = scmp.eq.s32.totalorder %s18, 1
      %p52 = scmp.ne.s32.totalorder %s47, %s49
      %p53 = scmp.eq.s32.totalorder %s18, 0
      %p54 = por %p52, %p53
      %p55 = scmp.ne.s32.totalorder %s47, %s49
      %p56 = scmp.eq.s32.totalorder %s23, 1
      %p57 = por %p55, %p56
      %p58 = scmp.ne.s32.totalorder %s49, %s50
      %p59 = scmp.eq.s32.totalorder %s23, 0
      %p60 = por %p58, %p59
      %p61 = scmp.ne.s32.totalorder %s49, %s50
      %p62 = scmp.eq.s32.totalorder %s24, 1
      %p63 = por %p61, %p62
      %p65 = scmp.ne.s32.totalorder %s50, %s64
      %p66 = scmp.eq.s32.totalorder %s24, 0
      %p67 = por %p65, %p66
      %s69 = sadd.s32 %s68, 1
      %p72 = scmp.eq.s32.totalorder %s18, 1
      %p73 = scmp.ne.s32.totalorder %s68, %s70
      %p74 = scmp.eq.s32.totalorder %s18, 0
      %p75 = por %p73, %p74
      %p76 = scmp.ne.s32.totalorder %s68, %s70
      %p77 = scmp.eq.s32.totalorder %s23, 1
      %p78 = por %p76, %p77
      %p79 = scmp.ne.s32.totalorder %s70, %s71
      %p80 = scmp.eq.s32.totalorder %s23, 0
      %p81 = por %p79, %p80
      %p82 = scmp.ne.s32.totalorder %s70, %s71
      %p83 = scmp.eq.s32.totalorder %s24, 1
      %p84 = por %p82, %p83
      %p86 = scmp.ne.s32.totalorder %s71, %s85
      %p87 = scmp.eq.s32.totalorder %s24, 0
      %p88 = por %p86, %p87
      %s90 = sadd.s32 %s89, 1
      %p93 = scmp.eq.s32.totalorder %s18, 1
      %p94 = scmp.ne.s32.totalorder %s89, %s91
      %p95 = scmp.eq.s32.totalorder %s18, 0
      %p96 = por %p94, %p95
      %p97 = scmp.ne.s32.totalorder %s89, %s91
      %p98 = scmp.eq.s32.totalorder %s23, 1
      %p99 = por %p97, %p98
      %p100 = scmp.ne.s32.totalorder %s91, %s92
      %p101 = scmp.eq.s32.totalorder %s23, 0
      %p102 = por %p100, %p101
      %p103 = scmp.ne.s32.totalorder %s91, %s92
      %p104 = scmp.eq.s32.totalorder %s24, 1
      %p105 = por %p103, %p104
      %p107 = scmp.ne.s32.totalorder %s92, %s106
      %p108 = scmp.eq.s32.totalorder %s24, 0
      %p109 = por %p107, %p108
      %s110 = ssub.s32 %s18, %s25
      %p111 = scmp.eq.s32.totalorder %s110, 0
      %s113 = sadd.s32 %s112, 1
      %s114 = scalar_select %p111, %s112, %s113
      %p117 = pneg %p111
      %p118 = scmp.eq.s32.totalorder %s18, 1
      %p119 = por %p117, %p118
      %p120 = scmp.ne.s32.totalorder %s112, %s115
      %p121 = scmp.eq.s32.totalorder %s18, 0
      %p122 = por %p120, %p121
      %p123 = scmp.ne.s32.totalorder %s112, %s115
      %p124 = scmp.eq.s32.totalorder %s23, 1
      %p125 = por %p123, %p124
      %p126 = scmp.ne.s32.totalorder %s115, %s116
      %p127 = scmp.eq.s32.totalorder %s23, 0
      %p128 = por %p126, %p127
      %p129 = scmp.ne.s32.totalorder %s115, %s116
      %p130 = scmp.eq.s32.totalorder %s24, 1
      %p131 = por %p129, %p130
      %p133 = scmp.ne.s32.totalorder %s116, %s132
      %p134 = scmp.eq.s32.totalorder %s24, 0
      %p135 = por %p133, %p134
      %s136 = ssub.s32 %s18, %s25
      %p137 = scmp.eq.s32.totalorder %s136, 0
      %s139 = sadd.s32 %s138, 1
      %s140 = scalar_select %p137, %s138, %s139
      %p143 = pneg %p137
      %p144 = scmp.eq.s32.totalorder %s18, 1
      %p145 = por %p143, %p144
      %p146 = scmp.ne.s32.totalorder %s138, %s141
      %p147 = scmp.eq.s32.totalorder %s18, 0
      %p148 = por %p146, %p147
      %p149 = scmp.ne.s32.totalorder %s138, %s141
      %p150 = scmp.eq.s32.totalorder %s23, 1
      %p151 = por %p149, %p150
      %p152 = scmp.ne.s32.totalorder %s141, %s142
      %p153 = scmp.eq.s32.totalorder %s23, 0
      %p154 = por %p152, %p153
      %p155 = scmp.ne.s32.totalorder %s141, %s142
      %p156 = scmp.eq.s32.totalorder %s24, 1
      %p157 = por %p155, %p156
      %p159 = scmp.ne.s32.totalorder %s142, %s158
      %p160 = scmp.eq.s32.totalorder %s24, 0
      %p161 = por %p159, %p160
      %s162 = ssub.s32 %s18, %s25
      %p163 = scmp.eq.s32.totalorder %s162, 0
      %s165 = sadd.s32 %s164, 1
      %s166 = scalar_select %p163, %s164, %s165
      %p169 = pneg %p163
      %p170 = scmp.eq.s32.totalorder %s18, 1
      %p171 = por %p169, %p170
      %p172 = scmp.ne.s32.totalorder %s164, %s167
      %p173 = scmp.eq.s32.totalorder %s18, 0
      %p174 = por %p172, %p173
      %p175 = scmp.ne.s32.totalorder %s164, %s167
      %p176 = scmp.eq.s32.totalorder %s23, 1
      %p177 = por %p175, %p176
      %p178 = scmp.ne.s32.totalorder %s167, %s168
      %p179 = scmp.eq.s32.totalorder %s23, 0
      %p180 = por %p178, %p179
      %p181 = scmp.ne.s32.totalorder %s167, %s168
      %p182 = scmp.eq.s32.totalorder %s24, 1
      %p183 = por %p181, %p182
      %p185 = scmp.ne.s32.totalorder %s168, %s184
      %p186 = scmp.eq.s32.totalorder %s24, 0
      %p187 = por %p185, %p186
      %s188 = ssub.s32 %s18, %s25
      %p189 = scmp.eq.s32.totalorder %s188, 0
      %s191 = sadd.s32 %s190, 1
      %s192 = scalar_select %p189, %s190, %s191
      %p195 = pneg %p189
      %p196 = scmp.eq.s32.totalorder %s18, 1
      %p197 = por %p195, %p196
      %p198 = scmp.ne.s32.totalorder %s190, %s193
      %p199 = scmp.eq.s32.totalorder %s18, 0
      %p200 = por %p198, %p199
      %p201 = scmp.ne.s32.totalorder %s190, %s193
      %p202 = scmp.eq.s32.totalorder %s23, 1
      %p203 = por %p201, %p202
      %p204 = scmp.ne.s32.totalorder %s193, %s194
      %p205 = scmp.eq.s32.totalorder %s23, 0
      %p206 = por %p204, %p205
      %p207 = scmp.ne.s32.totalorder %s193, %s194
      %p208 = scmp.eq.s32.totalorder %s24, 1
      %p209 = por %p207, %p208
      %p211 = scmp.ne.s32.totalorder %s194, %s210
      %p212 = scmp.eq.s32.totalorder %s24, 0
      %p213 = por %p211, %p212
      %s214 = ssub.s32 %s18, %s25
      %p215 = scmp.eq.s32.totalorder %s214, 0
      %s217 = sadd.s32 %s216, 1
      %s218 = scalar_select %p215, %s216, %s217
      %p221 = pneg %p215
      %p222 = scmp.eq.s32.totalorder %s18, 1
      %p223 = por %p221, %p222
      %p224 = scmp.ne.s32.totalorder %s216, %s219
      %p225 = scmp.eq.s32.totalorder %s18, 0
      %p226 = por %p224, %p225
      %p227 = scmp.ne.s32.totalorder %s216, %s219
      %p228 = scmp.eq.s32.totalorder %s23, 1
      %p229 = por %p227, %p228
      %p230 = scmp.ne.s32.totalorder %s219, %s220
      %p231 = scmp.eq.s32.totalorder %s23, 0
      %p232 = por %p230, %p231
      %p233 = scmp.ne.s32.totalorder %s219, %s220
      %p234 = scmp.eq.s32.totalorder %s24, 1
      %p235 = por %p233, %p234
      %p237 = scmp.ne.s32.totalorder %s220, %s236
      %p238 = scmp.eq.s32.totalorder %s24, 0
      %p239 = por %p237, %p238
      %s240 = ssub.s32 %s18, %s25
      %p241 = scmp.eq.s32.totalorder %s240, 0
      %s243 = sadd.s32 %s242, 1
      %s244 = scalar_select %p241, %s242, %s243
      %p247 = pneg %p241
      %p248 = scmp.eq.s32.totalorder %s18, 1
      %p249 = por %p247, %p248
      %p250 = scmp.ne.s32.totalorder %s242, %s245
      %p251 = scmp.eq.s32.totalorder %s18, 0
      %p252 = por %p250, %p251
      %p253 = scmp.ne.s32.totalorder %s242, %s245
      %p254 = scmp.eq.s32.totalorder %s23, 1
      %p255 = por %p253, %p254
      %p256 = scmp.ne.s32.totalorder %s245, %s246
      %p257 = scmp.eq.s32.totalorder %s23, 0
      %p258 = por %p256, %p257
      %p259 = scmp.ne.s32.totalorder %s245, %s246
      %p260 = scmp.eq.s32.totalorder %s24, 1
      %p261 = por %p259, %p260
      %p263 = scmp.ne.s32.totalorder %s246, %s262
      %p264 = scmp.eq.s32.totalorder %s24, 0
      %p265 = por %p263, %p264
      %s267 = sadd.s32 %s266, 1
      %p270 = scmp.eq.s32.totalorder %s18, 1
      %p271 = scmp.ne.s32.totalorder %s266, %s268
      %p272 = scmp.eq.s32.totalorder %s18, 0
      %p273 = por %p271, %p272
      %p274 = scmp.ne.s32.totalorder %s266, %s268
      %p275 = scmp.eq.s32.totalorder %s23, 1
      %p276 = por %p274, %p275
      %p277 = scmp.ne.s32.totalorder %s268, %s269
      %p278 = scmp.eq.s32.totalorder %s23, 0
      %p279 = por %p277, %p278
      %p280 = scmp.ne.s32.totalorder %s268, %s269
      %p281 = scmp.eq.s32.totalorder %s24, 1
      %p282 = por %p280, %p281
      %p284 = scmp.ne.s32.totalorder %s269, %s283
      %p285 = scmp.eq.s32.totalorder %s24, 0
      %p286 = por %p284, %p285
      %s288 = sadd.s32 %s287, 1
      %p291 = scmp.eq.s32.totalorder %s18, 1
      %p292 = scmp.ne.s32.totalorder %s287, %s289
      %p293 = scmp.eq.s32.totalorder %s18, 0
      %p294 = por %p292, %p293
      %p295 = scmp.ne.s32.totalorder %s287, %s289
      %p296 = scmp.eq.s32.totalorder %s23, 1
      %p297 = por %p295, %p296
      %p298 = scmp.ne.s32.totalorder %s289, %s290
      %p299 = scmp.eq.s32.totalorder %s23, 0
      %p300 = por %p298, %p299
      %p301 = scmp.ne.s32.totalorder %s289, %s290
      %p302 = scmp.eq.s32.totalorder %s24, 1
      %p303 = por %p301, %p302
      %p305 = scmp.ne.s32.totalorder %s290, %s304
      %p306 = scmp.eq.s32.totalorder %s24, 0
      %p307 = por %p305, %p306
      %p308 = scmp.le.s32.totalorder 1, %s18
      %p309 = scmp.lt.s32.totalorder %s18, 3
      %p310 = pnand %p308, %p309
      %p311 = pneg %p310
      // Predicated region
      $region9: #{llama_forward.1} parent=5 // pred_check
        _
      $region10: #{llama_forward.1} parent=5 // pred_check_branch
        %313 = sbr.rel (%p310) target = $region12
      $region11: #{llama_forward.1} parent=5 // pred_region
        %s314 = ssub.s32 %s18, 1
        // Predicated region
        $region13: #{llama_forward.1} parent=11 // pred_check
          %p315 = pneg %p39
        $region14: #{llama_forward.1} parent=11 // pred_check_branch
          %317 = sbr.rel (%p315) target = $region16
        $region15: #{llama_forward.1} parent=11 // pred_region
          _
        $region16: #{llama_forward.1} parent=11 // pred_fallthru
          _
        // Predicated region
        $region17: #{llama_forward.1} parent=11 // pred_check
          %p318 = pneg %p60
        $region18: #{llama_forward.1} parent=11 // pred_check_branch
          %320 = sbr.rel (%p318) target = $region20
        $region19: #{llama_forward.1} parent=11 // pred_region
          _
        $region20: #{llama_forward.1} parent=11 // pred_fallthru
          _
        // Predicated region
        $region21: #{llama_forward.1} parent=11 // pred_check
          %p321 = pneg %p81
        $region22: #{llama_forward.1} parent=11 // pred_check_branch
          %323 = sbr.rel (%p321) target = $region24
        $region23: #{llama_forward.1} parent=11 // pred_region
          _
        $region24: #{llama_forward.1} parent=11 // pred_fallthru
          _
        // Predicated region
        $region25: #{llama_forward.1} parent=11 // pred_check
          %p324 = pneg %p102
        $region26: #{llama_forward.1} parent=11 // pred_check_branch
          %326 = sbr.rel (%p324) target = $region28
        $region27: #{llama_forward.1} parent=11 // pred_region
          _
        $region28: #{llama_forward.1} parent=11 // pred_fallthru
          _
        // Predicated region
        $region29: #{llama_forward.1} parent=11 // pred_check
          %p327 = pneg %p279
        $region30: #{llama_forward.1} parent=11 // pred_check_branch
          %329 = sbr.rel (%p327) target = $region32
        $region31: #{llama_forward.1} parent=11 // pred_region
          _
        $region32: #{llama_forward.1} parent=11 // pred_fallthru
          _
      $region12: #{llama_forward.1} parent=5 // pred_fallthru
        _
      %p330 = scmp.lt.s32.totalorder %s18, 2
      // Predicated region
      $region33: #{llama_forward.1} parent=5 // pred_check
        %p331 = pneg %p330
      $region34: #{llama_forward.1} parent=5 // pred_check_branch
        %333 = sbr.rel (%p331) target = $region36
      $region35: #{llama_forward.1} parent=5 // pred_region
        // Predicated region
        $region37: #{llama_forward.1} parent=35 // pred_check
          %p334 = pneg %p122
        $region38: #{llama_forward.1} parent=35 // pred_check_branch
          %336 = sbr.rel (%p334) target = $region40
        $region39: #{llama_forward.1} parent=35 // pred_region
          %p337 = scmp.lt.s32.totalorder %s18, 1
          %s338 = scalar_select %p337, %s18, 1
          %s339 = scalar_lea.vmem %s4, %s338
        $region40: #{llama_forward.1} parent=35 // pred_fallthru
          _
        // Predicated region
        $region41: #{llama_forward.1} parent=35 // pred_check
          %p340 = pneg %p148
        $region42: #{llama_forward.1} parent=35 // pred_check_branch
          %342 = sbr.rel (%p340) target = $region44
        $region43: #{llama_forward.1} parent=35 // pred_region
          %p343 = scmp.lt.s32.totalorder %s18, 1
          %s344 = scalar_select %p343, %s18, 1
          %s345 = smul.addr %s344, 8
          %s346 = smul.addr %s345, 4
          %s347 = scalar_lea.vmem %s5, %s346
        $region44: #{llama_forward.1} parent=35 // pred_fallthru
          _
        // Predicated region
        $region45: #{llama_forward.1} parent=35 // pred_check
          %p348 = pneg %p174
        $region46: #{llama_forward.1} parent=35 // pred_check_branch
          %350 = sbr.rel (%p348) target = $region48
        $region47: #{llama_forward.1} parent=35 // pred_region
          %p351 = scmp.lt.s32.totalorder %s18, 1
          %s352 = scalar_select %p351, %s18, 1
          %s353 = smul.addr %s352, 8
          %s354 = smul.addr %s353, 4
          %s355 = scalar_lea.vmem %s6, %s354
        $region48: #{llama_forward.1} parent=35 // pred_fallthru
          _
        // Predicated region
        $region49: #{llama_forward.1} parent=35 // pred_check
          %p356 = pneg %p200
        $region50: #{llama_forward.1} parent=35 // pred_check_branch
          %358 = sbr.rel (%p356) target = $region52
        $region51: #{llama_forward.1} parent=35 // pred_region
          %p359 = scmp.lt.s32.totalorder %s18, 1
          %s360 = scalar_select %p359, %s18, 1
          %s361 = scalar_lea.vmem %s7, %s360
        $region52: #{llama_forward.1} parent=35 // pred_fallthru
          _
        // Predicated region
        $region53: #{llama_forward.1} parent=35 // pred_check
          %p362 = pneg %p226
        $region54: #{llama_forward.1} parent=35 // pred_check_branch
          %364 = sbr.rel (%p362) target = $region56
        $region55: #{llama_forward.1} parent=35 // pred_region
          %p365 = scmp.lt.s32.totalorder %s18, 1
          %s366 = scalar_select %p365, %s18, 1
          %s367 = smul.addr %s366, 16
          %s368 = smul.addr %s367, 4
          %s369 = scalar_lea.vmem %s8, %s368
        $region56: #{llama_forward.1} parent=35 // pred_fallthru
          _
        // Predicated region
        $region57: #{llama_forward.1} parent=35 // pred_check
          %p370 = pneg %p252
        $region58: #{llama_forward.1} parent=35 // pred_check_branch
          %372 = sbr.rel (%p370) target = $region60
        $region59: #{llama_forward.1} parent=35 // pred_region
          %p373 = scmp.lt.s32.totalorder %s18, 1
          %s374 = scalar_select %p373, %s18, 1
          %s375 = smul.addr %s374, 16
          %s376 = smul.addr %s375, 4
          %s377 = scalar_lea.vmem %s9, %s376
        $region60: #{llama_forward.1} parent=35 // pred_fallthru
          _
      $region36: #{llama_forward.1} parent=5 // pred_fallthru
        _
      %p378 = scmp.le.s32.totalorder 1, %s18
      %p379 = scmp.lt.s32.totalorder %s18, 3
      %p380 = pnand %p378, %p379
      %p381 = pneg %p380
      // Predicated region
      $region61: #{llama_forward.1} parent=5 // pred_check
        _
      $region62: #{llama_forward.1} parent=5 // pred_check_branch
        %383 = sbr.rel (%p380) target = $region64
      $region63: #{llama_forward.1} parent=5 // pred_region
        %s384 = ssub.s32 %s18, 1
        %p385 = pneg %p39
        %p386 = pneg %p36
        %p387 = pneg %p60
        %p388 = pneg %p57
        %p389 = pneg %p81
        %p390 = pneg %p78
        %p391 = pneg %p102
        %p392 = pneg %p99
        %p393 = scmp.lt.s32.totalorder %s23, 1
        %s394 = scalar_select %p393, %s23, 1
        %s395 = scalar_lea.vmem %s4, %s394
        %p396 = pneg %p128
        %p397 = pneg %p125
        %p398 = scmp.lt.s32.totalorder %s23, 1
        %s399 = scalar_select %p398, %s23, 1
        %s400 = smul.addr %s399, 8
        %s401 = smul.addr %s400, 4
        %s402 = scalar_lea.vmem %s5, %s401
        %p403 = pneg %p154
        %p404 = pneg %p151
        %p405 = scmp.lt.s32.totalorder %s23, 1
        %s406 = scalar_select %p405, %s23, 1
        %s407 = smul.addr %s406, 8
        %s408 = smul.addr %s407, 4
        %s409 = scalar_lea.vmem %s6, %s408
        %p410 = pneg %p180
        %p411 = pneg %p177
        %p412 = scmp.lt.s32.totalorder %s23, 1
        %s413 = scalar_select %p412, %s23, 1
        %s414 = scalar_lea.vmem %s7, %s413
        %p415 = pneg %p206
        %p416 = pneg %p203
        %p417 = scmp.lt.s32.totalorder %s23, 1
        %s418 = scalar_select %p417, %s23, 1
        %s419 = smul.addr %s418, 16
        %s420 = smul.addr %s419, 4
        %s421 = scalar_lea.vmem %s8, %s420
        %p422 = pneg %p232
        %p423 = pneg %p229
        %p424 = scmp.lt.s32.totalorder %s23, 1
        %s425 = scalar_select %p424, %s23, 1
        %s426 = smul.addr %s425, 16
        %s427 = smul.addr %s426, 4
        %s428 = scalar_lea.vmem %s9, %s427
        %p429 = pneg %p258
        %p430 = pneg %p255
        %p431 = pneg %p279
        %p432 = pneg %p276
        %p433 = pneg %p300
        %p434 = pneg %p297
        %p435 = scmp.lt.s32.totalorder %s23, 1
        %s436 = scalar_select %p435, %s23, 1
        %s437 = scalar_lea.vmem %s4, %s436
        %p438 = scmp.lt.s32.totalorder %s23, 1
        %s439 = scalar_select %p438, %s23, 1
        %s440 = smul.addr %s439, 8
        %s441 = smul.addr %s440, 4
        %s442 = scalar_lea.vmem %s5, %s441
        %p443 = scmp.lt.s32.totalorder %s23, 1
        %s444 = scalar_select %p443, %s23, 1
        %s445 = smul.addr %s444, 8
        %s446 = smul.addr %s445, 4
        %s447 = scalar_lea.vmem %s6, %s446
        %p448 = scmp.lt.s32.totalorder %s23, 1
        %s449 = scalar_select %p448, %s23, 1
        %s450 = scalar_lea.vmem %s7, %s449
        %p451 = scmp.lt.s32.totalorder %s23, 1
        %s452 = scalar_select %p451, %s23, 1
        %s453 = smul.addr %s452, 16
        %s454 = smul.addr %s453, 4
        %s455 = scalar_lea.vmem %s8, %s454
        %p456 = scmp.lt.s32.totalorder %s23, 1
        %s457 = scalar_select %p456, %s23, 1
        %s458 = smul.addr %s457, 16
        %s459 = smul.addr %s458, 4
        %s460 = scalar_lea.vmem %s9, %s459
        %p462 = scmp.eq.s32.totalorder %s23, 0
        // Predicated region
        $region65: #{llama_forward.1} parent=63 // pred_check
          %p463 = pneg %p462
        $region66: #{llama_forward.1} parent=63 // pred_check_branch
          %465 = sbr.rel (%p463) target = $region68
        $region67: #{llama_forward.1} parent=63 // pred_region
          %v466 = vld [vmem:[%s0] sm:$0xff]
          %vm467 = vcmask 523264
          %468 = vst.msk [vmem:[#allocation2] sm:$0xff] %vm467, %v466
        $region68: #{llama_forward.1} parent=63 // pred_fallthru
          _
        %v469 = vld [vmem:[#allocation2] sm:$0xff]
        %v470 = vmul.f32 %v469, %v469
        %vm471 = vcmask 523264
        %v472 = vsel %vm471, %v470, 0.0
        %473 = vadd.xlane.f32.xlu0 %v472
        %v474 = vpop.xlane.xlu0 %473
        %v475 = vrcp.pop 64.0
        %v476 = vmul.f32 %v474, %v475
        %v477 = vadd.f32 %v476, 1e-06
        %v478 = vrsqrt.pop %v477
        %v479 = vmul.f32 %v469, %v478
        %v480 = vld [vmem:[%s437] sm:$0x1]
        %v482 = vlaneseq
        %v483 = vshrl.u32 %v482, 7
        %v484 = vsub.s32 0, %v483
        %v485 = vrot.slane %v480, %v484
        %v487 = vmul.f32 %v479, %v485
        %v488 = vpack.c.bf16 %v487, %v487
        %v489 = vld [vmem:[%s442] sm:$0xf]
        %v490 = vld [vmem:[%s442 + $0x4] sm:$0xf]
        %v491 = vld [vmem:[%s442 + $0x8] sm:$0xf]
        %v492 = vld [vmem:[%s442 + $0xc] sm:$0xf]
        %v493 = vld [vmem:[%s442 + $0x10] sm:$0xf]
        %v494 = vld [vmem:[%s442 + $0x14] sm:$0xf]
        %v495 = vld [vmem:[%s442 + $0x18] sm:$0xf]
        %v496 = vld [vmem:[%s442 + $0x1c] sm:$0xf]
        %v505 = vunpack.c.l.b16 %v489
        %v506 = vunpack.c.l.b16 %v490
        %v507 = vunpack.c.l.b16 %v491
        %v508 = vunpack.c.l.b16 %v492
        %v509 = vunpack.c.l.b16 %v493
        %v510 = vunpack.c.l.b16 %v494
        %v511 = vunpack.c.l.b16 %v495
        %v512 = vunpack.c.l.b16 %v496
        %v513 = vpack.c.b16 %v506, %v505
        %v514 = vpack.c.b16 %v508, %v507
        %v515 = vpack.c.b16 %v510, %v509
        %v516 = vpack.c.b16 %v512, %v511
        %v522 = vsel %vm471, %v488, 0
        %524 = vmatprep.subr.bf16.mxu0 0
        %525 = vmatpush1.bf16.msra.mxu0 %v513
        %526 = vmatprep.subr.bf16.mxu0 0
        %527 = vmatpush1.bf16.msra.mxu0 %v514
        %528 = vmatprep.subr.bf16.mxu0 0
        %529 = vmatpush1.bf16.msra.mxu0 %v515
        %530 = vmatprep.subr.bf16.mxu0 0
        %531 = vmatpush1.bf16.msra.mxu0 %v516
        %532 = vmatprep.subr.bf16.mxu0 0
        %533 = vmatpush1.bf16.msra.mxu0 0
        %534 = vmatprep.subr.bf16.mxu0 0
        %535 = vmatpush1.bf16.msra.mxu0 0
        %536 = vmatprep.subr.bf16.mxu0 0
        %537 = vmatpush1.bf16.msra.mxu0 0
        %538 = vmatprep.subr.bf16.mxu0 0
        %539 = vmatpush1.bf16.msra.mxu0 0
        %540 = vmatprep.subr.bf16.mxu0 0
        %541 = vmatpush1.bf16.msra.mxu0 0
        %542 = vmatprep.subr.bf16.mxu0 0
        %543 = vmatpush1.bf16.msra.mxu0 0
        %544 = vmatprep.subr.bf16.mxu0 0
        %545 = vmatpush1.bf16.msra.mxu0 0
        %546 = vmatprep.subr.bf16.mxu0 0
        %547 = vmatpush1.bf16.msra.mxu0 0
        %548 = vmatprep.subr.bf16.mxu0 0
        %549 = vmatpush1.bf16.msra.mxu0 0
        %550 = vmatprep.subr.bf16.mxu0 0
        %551 = vmatpush1.bf16.msra.mxu0 0
        %552 = vmatprep.subr.bf16.mxu0 0
        %553 = vmatpush1.bf16.msra.mxu0 0
        %554 = vmatprep.subr.bf16.mxu0 0
        %555 = vmatpush1.bf16.msra.mxu0 0
        %556 = vmatprep.mubr.bf16.mxu0 0
        %557 = vmatmul.mubr.bf16.gmra.mrb[0].mxu0 %v522
        %v558 = vpop.f32.mrb[0].mxu0
        %v559 = vadd.f32 0.0, %v558
        %v560 = vpop.f32.mrb[0].mxu0
        %v561 = vpop.f32.mrb[0].mxu0
        %v562 = vpop.f32.mrb[0].mxu0
        %563 = vdwg.mxu0
        %v564 = vld [vmem:[%s3] sm:$0xff]
        %v565 = vld [vmem:[%s3 + $0x8] sm:$0xff]
        %v566 = vld [vmem:[%s3 + $0x10] sm:$0xff]
        %v567 = vld [vmem:[%s3 + $0x18] sm:$0xff]
        %v568 = vld [vmem:[%s3 + $0x20] sm:$0xff]
        %v569 = vld [vmem:[%s3 + $0x28] sm:$0xff]
        %v570 = vld [vmem:[%s3 + $0x30] sm:$0xff]
        %v571 = vld [vmem:[%s3 + $0x38] sm:$0xff]
        %v572 = vld [vmem:[%s3 + $0x40] sm:$0xff]
        %v573 = vld [vmem:[%s3 + $0x48] sm:$0xff]
        %v574 = vld [vmem:[%s3 + $0x50] sm:$0xff]
        %v575 = vld [vmem:[%s3 + $0x58] sm:$0xff]
        %v576 = vld [vmem:[%s3 + $0x60] sm:$0xff]
        %v577 = vld [vmem:[%s3 + $0x68] sm:$0xff]
        %v578 = vld [vmem:[%s3 + $0x70] sm:$0xff]
        %v579 = vld [vmem:[%s3 + $0x78] sm:$0xff]
        %580 = vmatprep.subr.mxu0 0.0
        %581 = vmatpush1.msra.mxu0 %v564
        %582 = vmatprep.subr.mxu0 0.0
        %583 = vmatpush1.msra.mxu0 %v565
        %584 = vmatprep.subr.mxu0 0.0
        %585 = vmatpush1.msra.mxu0 %v566
        %586 = vmatprep.subr.mxu0 0.0
        %587 = vmatpush1.msra.mxu0 %v567
        %588 = vmatprep.subr.mxu0 0.0
        %589 = vmatpush1.msra.mxu0 %v568
        %590 = vmatprep.subr.mxu0 0.0
        %591 = vmatpush1.msra.mxu0 %v569
        %592 = vmatprep.subr.mxu0 0.0
        %593 = vmatpush1.msra.mxu0 %v570
        %594 = vmatprep.subr.mxu0 0.0
        %595 = vmatpush1.msra.mxu0 %v571
        %596 = vmatprep.subr.mxu0 0.0
        %597 = vmatpush1.msra.mxu0 %v572
        %598 = vmatprep.subr.mxu0 0.0
        %599 = vmatpush1.msra.mxu0 %v573
        %600 = vmatprep.subr.mxu0 0.0
        %601 = vmatpush1.msra.mxu0 %v574
        %602 = vmatprep.subr.mxu0 0.0
        %603 = vmatpush1.msra.mxu0 %v575
        %604 = vmatprep.subr.mxu0 0.0
        %605 = vmatpush1.msra.mxu0 %v576
        %606 = vmatprep.subr.mxu0 0.0
        %607 = vmatpush1.msra.mxu0 %v577
        %608 = vmatprep.subr.mxu0 0.0
        %609 = vmatpush1.msra.mxu0 %v578
        %610 = vmatprep.subr.mxu0 0.0
        %611 = vmatpush1.msra.mxu0 %v579
        %612 = vmatprep.subr.mxu0 0.0
        %613 = vmatpush1.msra.mxu0 0.0
        %614 = vmatprep.subr.mxu0 0.0
        %615 = vmatpush1.msra.mxu0 0.0
        %616 = vmatprep.subr.mxu0 0.0
        %617 = vmatpush1.msra.mxu0 0.0
        %618 = vmatprep.subr.mxu0 0.0
        %619 = vmatpush1.msra.mxu0 0.0
        %620 = vmatprep.subr.mxu0 0.0
        %621 = vmatpush1.msra.mxu0 0.0
        %622 = vmatprep.subr.mxu0 0.0
        %623 = vmatpush1.msra.mxu0 0.0
        %624 = vmatprep.subr.mxu0 0.0
        %625 = vmatpush1.msra.mxu0 0.0
        %626 = vmatprep.subr.mxu0 0.0
        %627 = vmatpush1.msra.mxu0 0.0
        %628 = vmatprep.subr.mxu0 0.0
        %629 = vmatpush1.msra.mxu0 0.0
        %630 = vmatprep.subr.mxu0 0.0
        %631 = vmatpush1.msra.mxu0 0.0
        %632 = vmatprep.subr.mxu0 0.0
        %633 = vmatpush1.msra.mxu0 0.0
        %634 = vmatprep.subr.mxu0 0.0
        %635 = vmatpush1.msra.mxu0 0.0
        %636 = vmatprep.subr.mxu0 0.0
        %637 = vmatpush1.msra.mxu0 0.0
        %638 = vmatprep.subr.mxu0 0.0
        %639 = vmatpush1.msra.mxu0 0.0
        %640 = vmatprep.subr.mxu0 0.0
        %641 = vmatpush1.msra.mxu0 0.0
        %642 = vmatprep.subr.mxu0 0.0
        %643 = vmatpush1.msra.mxu0 0.0
        %644 = vmatprep.mubr.f32.mxu0 0.0
        %645 = vmatmul.mubr.f32.gmra.mrb[0].mxu0 %v559
        %v646 = vpop.f32.mrb[0].mxu0
        %v647 = vadd.f32 0.0, %v646
        %v648 = vpop.f32.mrb[0].mxu0
        %649 = vdwg.mxu0
        %v650 = vld [vmem:[%s1] sm:$0xff]
        %v651 = vmul.f32 %v559, %v650
        %v652 = vld [vmem:[%s2] sm:$0xff]
        %v653 = vmul.f32 %v647, %v652
        %v654 = vadd.f32 %v651, %v653
        %v655 = vlaneseq
        %v656 = vshrl.u32 %v655, 7
        %v657 = vlaneseq
        %v658 = vand.u32 %v657, 127
        %vm659 = vcmp.le.s32.totalorder %v658, %v656
        %661 = vrot.lane.b32.xlu0 %v654, 64
        %v662 = vpop.permute.xlu0 %661
        %vm663 = vcmask 130048
        %v664 = vsel %vm663, %v654, 0
        %v666 = vsel %vm663, %v662, 0
        %668 = vmatprep.subr.mxu0 0.0
        %669 = vmatpush1.xpose.msra.mxu0 %v666
        %670 = vmatprep.subr.mxu0 0.0
        %671 = vmatpush1.xpose.msra.mxu0 0.0
        %672 = vmatprep.subr.mxu0 0.0
        %673 = vmatpush1.xpose.msra.mxu0 0.0
        %674 = vmatprep.subr.mxu0 0.0
        %675 = vmatpush1.xpose.msra.mxu0 0.0
        %676 = vmatprep.subr.mxu0 0.0
        %677 = vmatpush1.xpose.msra.mxu0 0.0
        %678 = vmatprep.subr.mxu0 0.0
        %679 = vmatpush1.xpose.msra.mxu0 0.0
        %680 = vmatprep.subr.mxu0 0.0
        %681 = vmatpush1.xpose.msra.mxu0 0.0
        %682 = vmatprep.subr.mxu0 0.0
        %683 = vmatpush1.xpose.msra.mxu0 0.0
        %684 = vmatprep.subr.mxu0 0.0
        %685 = vmatpush1.xpose.msra.mxu0 0.0
        %686 = vmatprep.subr.mxu0 0.0
        %687 = vmatpush1.xpose.msra.mxu0 0.0
        %688 = vmatprep.subr.mxu0 0.0
        %689 = vmatpush1.xpose.msra.mxu0 0.0
        %690 = vmatprep.subr.mxu0 0.0
        %691 = vmatpush1.xpose.msra.mxu0 0.0
        %692 = vmatprep.subr.mxu0 0.0
        %693 = vmatpush1.xpose.msra.mxu0 0.0
        %694 = vmatprep.subr.mxu0 0.0
        %695 = vmatpush1.xpose.msra.mxu0 0.0
        %696 = vmatprep.subr.mxu0 0.0
        %697 = vmatpush1.xpose.msra.mxu0 0.0
        %698 = vmatprep.subr.mxu0 0.0
        %699 = vmatpush1.xpose.msra.mxu0 0.0
        %700 = vmatprep.subr.mxu0 0.0
        %701 = vmatpush1.xpose.msra.mxu0 0.0
        %702 = vmatprep.subr.mxu0 0.0
        %703 = vmatpush1.xpose.msra.mxu0 0.0
        %704 = vmatprep.subr.mxu0 0.0
        %705 = vmatpush1.xpose.msra.mxu0 0.0
        %706 = vmatprep.subr.mxu0 0.0
        %707 = vmatpush1.xpose.msra.mxu0 0.0
        %708 = vmatprep.subr.mxu0 0.0
        %709 = vmatpush1.xpose.msra.mxu0 0.0
        %710 = vmatprep.subr.mxu0 0.0
        %711 = vmatpush1.xpose.msra.mxu0 0.0
        %712 = vmatprep.subr.mxu0 0.0
        %713 = vmatpush1.xpose.msra.mxu0 0.0
        %714 = vmatprep.subr.mxu0 0.0
        %715 = vmatpush1.xpose.msra.mxu0 0.0
        %716 = vmatprep.subr.mxu0 0.0
        %717 = vmatpush1.xpose.msra.mxu0 0.0
        %718 = vmatprep.subr.mxu0 0.0
        %719 = vmatpush1.xpose.msra.mxu0 0.0
        %720 = vmatprep.subr.mxu0 0.0
        %721 = vmatpush1.xpose.msra.mxu0 0.0
        %722 = vmatprep.subr.mxu0 0.0
        %723 = vmatpush1.xpose.msra.mxu0 0.0
        %724 = vmatprep.subr.mxu0 0.0
        %725 = vmatpush1.xpose.msra.mxu0 0.0
        %726 = vmatprep.subr.mxu0 0.0
        %727 = vmatpush1.xpose.msra.mxu0 0.0
        %728 = vmatprep.subr.mxu0 0.0
        %729 = vmatpush1.xpose.msra.mxu0 0.0
        %730 = vmatprep.subr.mxu0 0.0
        %731 = vmatpush1.xpose.msra.mxu0 0.0
        %732 = vmatprep.mubr.f32.mxu0 0.0
        %733 = vmatmul.mubr.f32.gmra.mrb[0].mxu0 %v664
        %v734 = vpop.f32.mrb[0].mxu0
        %v735 = vadd.f32 0.0, %v734
        %v736 = vpop.f32.mrb[0].mxu0
        %737 = vdwg.mxu0
        %v738 = vmul.f32 %v735, 0.25
        %v739 = vsel %vm659, %v738, -1e+30
        %vm740 = vcmask 64512
        %v741 = vsel %vm740, %v739, -inf
        %742 = vmax.xlane.f32.xlu0 %v741
        %v743 = vpop.xlane.xlu0 %742
        %v744 = vsub.f32 %v739, %v743
        %v745 = vmul.f32 %v744, 1.442695
        %v746 = vpow.pop %v745
        %v747 = vsel %vm740, %v746, 0.0
        %748 = vadd.xlane.f32.xlu0 %v747
        %v749 = vpop.xlane.xlu0 %748
        %v750 = vrcp.pop %v749
        %v751 = vmul.f32 %v746, %v750
        %752 = vrot.lane.b32.xlu0 %v654, 32
        %v753 = vpop.permute.xlu0 %752
        %v756 = vsel %vm740, %v751, 0
        %758 = vmatprep.subr.mxu0 0.0
        %759 = vmatpush1.msra.mxu0 %v753
        %760 = vmatprep.subr.mxu0 0.0
        %761 = vmatpush1.msra.mxu0 0.0
        %762 = vmatprep.subr.mxu0 0.0
        %763 = vmatpush1.msra.mxu0 0.0
        %764 = vmatprep.subr.mxu0 0.0
        %765 = vmatpush1.msra.mxu0 0.0
        %766 = vmatprep.subr.mxu0 0.0
        %767 = vmatpush1.msra.mxu0 0.0
        %768 = vmatprep.subr.mxu0 0.0
        %769 = vmatpush1.msra.mxu0 0.0
        %770 = vmatprep.subr.mxu0 0.0
        %771 = vmatpush1.msra.mxu0 0.0
        %772 = vmatprep.subr.mxu0 0.0
        %773 = vmatpush1.msra.mxu0 0.0
        %774 = vmatprep.subr.mxu0 0.0
        %775 = vmatpush1.msra.mxu0 0.0
        %776 = vmatprep.subr.mxu0 0.0
        %777 = vmatpush1.msra.mxu0 0.0
        %778 = vmatprep.subr.mxu0 0.0
        %779 = vmatpush1.msra.mxu0 0.0
        %780 = vmatprep.subr.mxu0 0.0
        %781 = vmatpush1.msra.mxu0 0.0
        %782 = vmatprep.subr.mxu0 0.0
        %783 = vmatpush1.msra.mxu0 0.0
        %784 = vmatprep.subr.mxu0 0.0
        %785 = vmatpush1.msra.mxu0 0.0
        %786 = vmatprep.subr.mxu0 0.0
        %787 = vmatpush1.msra.mxu0 0.0
        %788 = vmatprep.subr.mxu0 0.0
        %789 = vmatpush1.msra.mxu0 0.0
        %790 = vmatprep.subr.mxu0 0.0
        %791 = vmatpush1.msra.mxu0 0.0
        %792 = vmatprep.subr.mxu0 0.0
        %793 = vmatpush1.msra.mxu0 0.0
        %794 = vmatprep.subr.mxu0 0.0
        %795 = vmatpush1.msra.mxu0 0.0
        %796 = vmatprep.subr.mxu0 0.0
        %797 = vmatpush1.msra.mxu0 0.0
        %798 = vmatprep.subr.mxu0 0.0
        %799 = vmatpush1.msra.mxu0 0.0
        %800 = vmatprep.subr.mxu0 0.0
        %801 = vmatpush1.msra.mxu0 0.0
        %802 = vmatprep.subr.mxu0 0.0
        %803 = vmatpush1.msra.mxu0 0.0
        %804 = vmatprep.subr.mxu0 0.0
        %805 = vmatpush1.msra.mxu0 0.0
        %806 = vmatprep.subr.mxu0 0.0
        %807 = vmatpush1.msra.mxu0 0.0
        %808 = vmatprep.subr.mxu0 0.0
        %809 = vmatpush1.msra.mxu0 0.0
        %810 = vmatprep.subr.mxu0 0.0
        %811 = vmatpush1.msra.mxu0 0.0
        %812 = vmatprep.subr.mxu0 0.0
        %813 = vmatpush1.msra.mxu0 0.0
        %814 = vmatprep.subr.mxu0 0.0
        %815 = vmatpush1.msra.mxu0 0.0
        %816 = vmatprep.subr.mxu0 0.0
        %817 = vmatpush1.msra.mxu0 0.0
        %818 = vmatprep.subr.mxu0 0.0
        %819 = vmatpush1.msra.mxu0 0.0
        %820 = vmatprep.subr.mxu0 0.0
        %821 = vmatpush1.msra.mxu0 0.0
        %822 = vmatprep.mubr.f32.mxu0 0.0
        %823 = vmatmul.mubr.f32.gmra.mrb[0].mxu0 %v756
        %v824 = vpop.f32.mrb[0].mxu0
        %v825 = vadd.f32 0.0, %v824
        %v826 = vpop.f32.mrb[0].mxu0
        %827 = vdwg.mxu0
        %828 = vrot.lane.b32.xlu0 %v654, 112
        %v829 = vpop.permute.xlu0 %828
        %v830 = vsel %vm663, %v829, 0
        %832 = vmatprep.subr.mxu0 0.0
        %833 = vmatpush1.xpose.msra.mxu0 %v666
        %834 = vmatprep.subr.mxu0 0.0
        %835 = vmatpush1.xpose.msra.mxu0 0.0
        %836 = vmatprep.subr.mxu0 0.0
        %837 = vmatpush1.xpose.msra.mxu0 0.0
        %838 = vmatprep.subr.mxu0 0.0
        %839 = vmatpush1.xpose.msra.mxu0 0.0
        %840 = vmatprep.subr.mxu0 0.0
        %841 = vmatpush1.xpose.msra.mxu0 0.0
        %842 = vmatprep.subr.mxu0 0.0
        %843 = vmatpush1.xpose.msra.mxu0 0.0
        %844 = vmatprep.subr.mxu0 0.0
        %845 = vmatpush1.xpose.msra.mxu0 0.0
        %846 = vmatprep.subr.mxu0 0.0
        %847 = vmatpush1.xpose.msra.mxu0 0.0
        %848 = vmatprep.subr.mxu0 0.0
        %849 = vmatpush1.xpose.msra.mxu0 0.0
        %850 = vmatprep.subr.mxu0 0.0
        %851 = vmatpush1.xpose.msra.mxu0 0.0
        %852 = vmatprep.subr.mxu0 0.0
        %853 = vmatpush1.xpose.msra.mxu0 0.0
        %854 = vmatprep.subr.mxu0 0.0
        %855 = vmatpush1.xpose.msra.mxu0 0.0
        %856 = vmatprep.subr.mxu0 0.0
        %857 = vmatpush1.xpose.msra.mxu0 0.0
        %858 = vmatprep.subr.mxu0 0.0
        %859 = vmatpush1.xpose.msra.mxu0 0.0
        %860 = vmatprep.subr.mxu0 0.0
        %861 = vmatpush1.xpose.msra.mxu0 0.0
        %862 = vmatprep.subr.mxu0 0.0
        %863 = vmatpush1.xpose.msra.mxu0 0.0
        %864 = vmatprep.subr.mxu0 0.0
        %865 = vmatpush1.xpose.msra.mxu0 0.0
        %866 = vmatprep.subr.mxu0 0.0
        %867 = vmatpush1.xpose.msra.mxu0 0.0
        %868 = vmatprep.subr.mxu0 0.0
        %869 = vmatpush1.xpose.msra.mxu0 0.0
        %870 = vmatprep.subr.mxu0 0.0
        %871 = vmatpush1.xpose.msra.mxu0 0.0
        %872 = vmatprep.subr.mxu0 0.0
        %873 = vmatpush1.xpose.msra.mxu0 0.0
        %874 = vmatprep.subr.mxu0 0.0
        %875 = vmatpush1.xpose.msra.mxu0 0.0
        %876 = vmatprep.subr.mxu0 0.0
        %877 = vmatpush1.xpose.msra.mxu0 0.0
        %878 = vmatprep.subr.mxu0 0.0
        %879 = vmatpush1.xpose.msra.mxu0 0.0
        %880 = vmatprep.subr.mxu0 0.0
        %881 = vmatpush1.xpose.msra.mxu0 0.0
        %882 = vmatprep.subr.mxu0 0.0
        %883 = vmatpush1.xpose.msra.mxu0 0.0
        %884 = vmatprep.subr.mxu0 0.0
        %885 = vmatpush1.xpose.msra.mxu0 0.0
        %886 = vmatprep.subr.mxu0 0.0
        %887 = vmatpush1.xpose.msra.mxu0 0.0
        %888 = vmatprep.subr.mxu0 0.0
        %889 = vmatpush1.xpose.msra.mxu0 0.0
        %890 = vmatprep.subr.mxu0 0.0
        %891 = vmatpush1.xpose.msra.mxu0 0.0
        %892 = vmatprep.subr.mxu0 0.0
        %893 = vmatpush1.xpose.msra.mxu0 0.0
        %894 = vmatprep.subr.mxu0 0.0
        %895 = vmatpush1.xpose.msra.mxu0 0.0
        %896 = vmatprep.mubr.f32.mxu0 0.0
        %897 = vmatmul.mubr.f32.gmra.mrb[0].mxu0 %v830
        %v898 = vpop.f32.mrb[0].mxu0
        %v899 = vadd.f32 0.0, %v898
        %v900 = vpop.f32.mrb[0].mxu0
        %901 = vdwg.mxu0
        %v902 = vmul.f32 %v899, 0.25
        %v903 = vsel %vm659, %v902, -1e+30
        %v904 = vsel %vm740, %v903, -inf
        %905 = vmax.xlane.f32.xlu0 %v904
        %v906 = vpop.xlane.xlu0 %905
        %v907 = vsub.f32 %v903, %v906
        %v908 = vmul.f32 %v907, 1.442695
        %v909 = vpow.pop %v908
        %v910 = vsel %vm740, %v909, 0.0
        %911 = vadd.xlane.f32.xlu0 %v910
        %v912 = vpop.xlane.xlu0 %911
        %v913 = vrcp.pop %v912
        %v914 = vmul.f32 %v909, %v913
        %v916 = vsel %vm740, %v914, 0
        %918 = vmatprep.subr.mxu0 0.0
        %919 = vmatpush1.msra.mxu0 %v753
        %920 = vmatprep.subr.mxu0 0.0
        %921 = vmatpush1.msra.mxu0 0.0
        %922 = vmatprep.subr.mxu0 0.0
        %923 = vmatpush1.msra.mxu0 0.0
        %924 = vmatprep.subr.mxu0 0.0
        %925 = vmatpush1.msra.mxu0 0.0
        %926 = vmatprep.subr.mxu0 0.0
        %927 = vmatpush1.msra.mxu0 0.0
        %928 = vmatprep.subr.mxu0 0.0
        %929 = vmatpush1.msra.mxu0 0.0
        %930 = vmatprep.subr.mxu0 0.0
        %931 = vmatpush1.msra.mxu0 0.0
        %932 = vmatprep.subr.mxu0 0.0
        %933 = vmatpush1.msra.mxu0 0.0
        %934 = vmatprep.subr.mxu0 0.0
        %935 = vmatpush1.msra.mxu0 0.0
        %936 = vmatprep.subr.mxu0 0.0
        %937 = vmatpush1.msra.mxu0 0.0
        %938 = vmatprep.subr.mxu0 0.0
        %939 = vmatpush1.msra.mxu0 0.0
        %940 = vmatprep.subr.mxu0 0.0
        %941 = vmatpush1.msra.mxu0 0.0
        %942 = vmatprep.subr.mxu0 0.0
        %943 = vmatpush1.msra.mxu0 0.0
        %944 = vmatprep.subr.mxu0 0.0
        %945 = vmatpush1.msra.mxu0 0.0
        %946 = vmatprep.subr.mxu0 0.0
        %947 = vmatpush1.msra.mxu0 0.0
        %948 = vmatprep.subr.mxu0 0.0
        %949 = vmatpush1.msra.mxu0 0.0
        %950 = vmatprep.subr.mxu0 0.0
        %951 = vmatpush1.msra.mxu0 0.0
        %952 = vmatprep.subr.mxu0 0.0
        %953 = vmatpush1.msra.mxu0 0.0
        %954 = vmatprep.subr.mxu0 0.0
        %955 = vmatpush1.msra.mxu0 0.0
        %956 = vmatprep.subr.mxu0 0.0
        %957 = vmatpush1.msra.mxu0 0.0
        %958 = vmatprep.subr.mxu0 0.0
        %959 = vmatpush1.msra.mxu0 0.0
        %960 = vmatprep.subr.mxu0 0.0
        %961 = vmatpush1.msra.mxu0 0.0
        %962 = vmatprep.subr.mxu0 0.0
        %963 = vmatpush1.msra.mxu0 0.0
        %964 = vmatprep.subr.mxu0 0.0
        %965 = vmatpush1.msra.mxu0 0.0
        %966 = vmatprep.subr.mxu0 0.0
        %967 = vmatpush1.msra.mxu0 0.0
        %968 = vmatprep.subr.mxu0 0.0
        %969 = vmatpush1.msra.mxu0 0.0
        %970 = vmatprep.subr.mxu0 0.0
        %971 = vmatpush1.msra.mxu0 0.0
        %972 = vmatprep.subr.mxu0 0.0
        %973 = vmatpush1.msra.mxu0 0.0
        %974 = vmatprep.subr.mxu0 0.0
        %975 = vmatpush1.msra.mxu0 0.0
        %976 = vmatprep.subr.mxu0 0.0
        %977 = vmatpush1.msra.mxu0 0.0
        %978 = vmatprep.subr.mxu0 0.0
        %979 = vmatpush1.msra.mxu0 0.0
        %980 = vmatprep.subr.mxu0 0.0
        %981 = vmatpush1.msra.mxu0 0.0
        %982 = vmatprep.mubr.f32.mxu0 0.0
        %983 = vmatmul.mubr.f32.gmra.mrb[0].mxu0 %v916
        %v984 = vpop.f32.mrb[0].mxu0
        %v985 = vadd.f32 0.0, %v984
        %v986 = vpop.f32.mrb[0].mxu0
        %987 = vdwg.mxu0
        %988 = vrot.lane.b32.xlu0 %v654, 96
        %v989 = vpop.permute.xlu0 %988
        %990 = vrot.lane.b32.xlu0 %v654, 48
        %v991 = vpop.permute.xlu0 %990
        %v992 = vsel %vm663, %v989, 0
        %v994 = vsel %vm663, %v991, 0
        %996 = vmatprep.subr.mxu0 0.0
        %997 = vmatpush1.xpose.msra.mxu0 %v994
        %998 = vmatprep.subr.mxu0 0.0
        %999 = vmatpush1.xpose.msra.mxu0 0.0
        %1000 = vmatprep.subr.mxu0 0.0
        %1001 = vmatpush1.xpose.msra.mxu0 0.0
        %1002 = vmatprep.subr.mxu0 0.0
        %1003 = vmatpush1.xpose.msra.mxu0 0.0
        %1004 = vmatprep.subr.mxu0 0.0
        %1005 = vmatpush1.xpose.msra.mxu0 0.0
        %1006 = vmatprep.subr.mxu0 0.0
        %1007 = vmatpush1.xpose.msra.mxu0 0.0
        %1008 = vmatprep.subr.mxu0 0.0
        %1009 = vmatpush1.xpose.msra.mxu0 0.0
        %1010 = vmatprep.subr.mxu0 0.0
        %1011 = vmatpush1.xpose.msra.mxu0 0.0
        %1012 = vmatprep.subr.mxu0 0.0
        %1013 = vmatpush1.xpose.msra.mxu0 0.0
        %1014 = vmatprep.subr.mxu0 0.0
        %1015 = vmatpush1.xpose.msra.mxu0 0.0
        %1016 = vmatprep.subr.mxu0 0.0
        %1017 = vmatpush1.xpose.msra.mxu0 0.0
        %1018 = vmatprep.subr.mxu0 0.0
        %1019 = vmatpush1.xpose.msra.mxu0 0.0
        %1020 = vmatprep.subr.mxu0 0.0
        %1021 = vmatpush1.xpose.msra.mxu0 0.0
        %1022 = vmatprep.subr.mxu0 0.0
        %1023 = vmatpush1.xpose.msra.mxu0 0.0
        %1024 = vmatprep.subr.mxu0 0.0
        %1025 = vmatpush1.xpose.msra.mxu0 0.0
        %1026 = vmatprep.subr.mxu0 0.0
        %1027 = vmatpush1.xpose.msra.mxu0 0.0
        %1028 = vmatprep.subr.mxu0 0.0
        %1029 = vmatpush1.xpose.msra.mxu0 0.0
        %1030 = vmatprep.subr.mxu0 0.0
        %1031 = vmatpush1.xpose.msra.mxu0 0.0
        %1032 = vmatprep.subr.mxu0 0.0
        %1033 = vmatpush1.xpose.msra.mxu0 0.0
        %1034 = vmatprep.subr.mxu0 0.0
        %1035 = vmatpush1.xpose.msra.mxu0 0.0
        %1036 = vmatprep.subr.mxu0 0.0
        %1037 = vmatpush1.xpose.msra.mxu0 0.0
        %1038 = vmatprep.subr.mxu0 0.0
        %1039 = vmatpush1.xpose.msra.mxu0 0.0
        %1040 = vmatprep.subr.mxu0 0.0
        %1041 = vmatpush1.xpose.msra.mxu0 0.0
        %1042 = vmatprep.subr.mxu0 0.0
        %1043 = vmatpush1.xpose.msra.mxu0 0.0
        %1044 = vmatprep.subr.mxu0 0.0
        %1045 = vmatpush1.xpose.msra.mxu0 0.0
        %1046 = vmatprep.subr.mxu0 0.0
        %1047 = vmatpush1.xpose.msra.mxu0 0.0
        %1048 = vmatprep.subr.mxu0 0.0
        %1049 = vmatpush1.xpose.msra.mxu0 0.0
        %1050 = vmatprep.subr.mxu0 0.0
        %1051 = vmatpush1.xpose.msra.mxu0 0.0
        %1052 = vmatprep.subr.mxu0 0.0
        %1053 = vmatpush1.xpose.msra.mxu0 0.0
        %1054 = vmatprep.subr.mxu0 0.0
        %1055 = vmatpush1.xpose.msra.mxu0 0.0
        %1056 = vmatprep.subr.mxu0 0.0
        %1057 = vmatpush1.xpose.msra.mxu0 0.0
        %1058 = vmatprep.subr.mxu0 0.0
        %1059 = vmatpush1.xpose.msra.mxu0 0.0
        %1060 = vmatprep.mubr.f32.mxu0 0.0
        %1061 = vmatmul.mubr.f32.gmra.mrb[0].mxu0 %v992
        %v1062 = vpop.f32.mrb[0].mxu0
        %v1063 = vadd.f32 0.0, %v1062
        %v1064 = vpop.f32.mrb[0].mxu0
        %1065 = vdwg.mxu0
        %v1066 = vmul.f32 %v1063, 0.25
        %v1067 = vsel %vm659, %v1066, -1e+30
        %v1068 = vsel %vm740, %v1067, -inf
        %1069 = vmax.xlane.f32.xlu0 %v1068
        %v1070 = vpop.xlane.xlu0 %1069
        %v1071 = vsub.f32 %v1067, %v1070
        %v1072 = vmul.f32 %v1071, 1.442695
        %v1073 = vpow.pop %v1072
        %v1074 = vsel %vm740, %v1073, 0.0
        %1075 = vadd.xlane.f32.xlu0 %v1074
        %v1076 = vpop.xlane.xlu0 %1075
        %v1077 = vrcp.pop %v1076
        %v1078 = vmul.f32 %v1073, %v1077
        %1079 = vrot.lane.b32.xlu0 %v654, 16
        %v1080 = vpop.permute.xlu0 %1079
        %v1083 = vsel %vm740, %v1078, 0
        %1085 = vmatprep.subr.mxu0 0.0
        %1086 = vmatpush1.msra.mxu0 %v1080
        %1087 = vmatprep.subr.mxu0 0.0
        %1088 = vmatpush1.msra.mxu0 0.0
        %1089 = vmatprep.subr.mxu0 0.0
        %1090 = vmatpush1.msra.mxu0 0.0
        %1091 = vmatprep.subr.mxu0 0.0
        %1092 = vmatpush1.msra.mxu0 0.0
        %1093 = vmatprep.subr.mxu0 0.0
        %1094 = vmatpush1.msra.mxu0 0.0
        %1095 = vmatprep.subr.mxu0 0.0
        %1096 = vmatpush1.msra.mxu0 0.0
        %1097 = vmatprep.subr.mxu0 0.0
        %1098 = vmatpush1.msra.mxu0 0.0
        %1099 = vmatprep.subr.mxu0 0.0
        %1100 = vmatpush1.msra.mxu0 0.0
        %1101 = vmatprep.subr.mxu0 0.0
        %1102 = vmatpush1.msra.mxu0 0.0
        %1103 = vmatprep.subr.mxu0 0.0
        %1104 = vmatpush1.msra.mxu0 0.0
        %1105 = vmatprep.subr.mxu0 0.0
        %1106 = vmatpush1.msra.mxu0 0.0
        %1107 = vmatprep.subr.mxu0 0.0
        %1108 = vmatpush1.msra.mxu0 0.0
        %1109 = vmatprep.subr.mxu0 0.0
        %1110 = vmatpush1.msra.mxu0 0.0
        %1111 = vmatprep.subr.mxu0 0.0
        %1112 = vmatpush1.msra.mxu0 0.0
        %1113 = vmatprep.subr.mxu0 0.0
        %1114 = vmatpush1.msra.mxu0 0.0
        %1115 = vmatprep.subr.mxu0 0.0
        %1116 = vmatpush1.msra.mxu0 0.0
        %1117 = vmatprep.subr.mxu0 0.0
        %1118 = vmatpush1.msra.mxu0 0.0
        %1119 = vmatprep.subr.mxu0 0.0
        %1120 = vmatpush1.msra.mxu0 0.0
        %1121 = vmatprep.subr.mxu0 0.0
        %1122 = vmatpush1.msra.mxu0 0.0
        %1123 = vmatprep.subr.mxu0 0.0
        %1124 = vmatpush1.msra.mxu0 0.0
        %1125 = vmatprep.subr.mxu0 0.0
        %1126 = vmatpush1.msra.mxu0 0.0
        %1127 = vmatprep.subr.mxu0 0.0
        %1128 = vmatpush1.msra.mxu0 0.0
        %1129 = vmatprep.subr.mxu0 0.0
        %1130 = vmatpush1.msra.mxu0 0.0
        %1131 = vmatprep.subr.mxu0 0.0
        %1132 = vmatpush1.msra.mxu0 0.0
        %1133 = vmatprep.subr.mxu0 0.0
        %1134 = vmatpush1.msra.mxu0 0.0
        %1135 = vmatprep.subr.mxu0 0.0
        %1136 = vmatpush1.msra.mxu0 0.0
        %1137 = vmatprep.subr.mxu0 0.0
        %1138 = vmatpush1.msra.mxu0 0.0
        %1139 = vmatprep.subr.mxu0 0.0
        %1140 = vmatpush1.msra.mxu0 0.0
        %1141 = vmatprep.subr.mxu0 0.0
        %1142 = vmatpush1.msra.mxu0 0.0
        %1143 = vmatprep.subr.mxu0 0.0
        %1144 = vmatpush1.msra.mxu0 0.0
        %1145 = vmatprep.subr.mxu0 0.0
        %1146 = vmatpush1.msra.mxu0 0.0
        %1147 = vmatprep.subr.mxu0 0.0
        %1148 = vmatpush1.msra.mxu0 0.0
        %1149 = vmatprep.mubr.f32.mxu0 0.0
        %1150 = vmatmul.mubr.f32.gmra.mrb[0].mxu0 %v1083
        %v1151 = vpop.f32.mrb[0].mxu0
        %v1152 = vadd.f32 0.0, %v1151
        %v1153 = vpop.f32.mrb[0].mxu0
        %1154 = vdwg.mxu0
        %1155 = vrot.lane.b32.xlu0 %v654, 80
        %v1156 = vpop.permute.xlu0 %1155
        %v1157 = vsel %vm663, %v1156, 0
        %1159 = vmatprep.subr.mxu0 0.0
        %1160 = vmatpush1.xpose.msra.mxu0 %v994
        %1161 = vmatprep.subr.mxu0 0.0
        %1162 = vmatpush1.xpose.msra.mxu0 0.0
        %1163 = vmatprep.subr.mxu0 0.0
        %1164 = vmatpush1.xpose.msra.mxu0 0.0
        %1165 = vmatprep.subr.mxu0 0.0
        %1166 = vmatpush1.xpose.msra.mxu0 0.0
        %1167 = vmatprep.subr.mxu0 0.0
        %1168 = vmatpush1.xpose.msra.mxu0 0.0
        %1169 = vmatprep.subr.mxu0 0.0
        %1170 = vmatpush1.xpose.msra.mxu0 0.0
        %1171 = vmatprep.subr.mxu0 0.0
        %1172 = vmatpush1.xpose.msra.mxu0 0.0
        %1173 = vmatprep.subr.mxu0 0.0
        %1174 = vmatpush1.xpose.msra.mxu0 0.0
        %1175 = vmatprep.subr.mxu0 0.0
        %1176 = vmatpush1.xpose.msra.mxu0 0.0
        %1177 = vmatprep.subr.mxu0 0.0
        %1178 = vmatpush1.xpose.msra.mxu0 0.0
        %1179 = vmatprep.subr.mxu0 0.0
        %1180 = vmatpush1.xpose.msra.mxu0 0.0
        %1181 = vmatprep.subr.mxu0 0.0
        %1182 = vmatpush1.xpose.msra.mxu0 0.0
        %1183 = vmatprep.subr.mxu0 0.0
        %1184 = vmatpush1.xpose.msra.mxu0 0.0
        %1185 = vmatprep.subr.mxu0 0.0
        %1186 = vmatpush1.xpose.msra.mxu0 0.0
        %1187 = vmatprep.subr.mxu0 0.0
        %1188 = vmatpush1.xpose.msra.mxu0 0.0
        %1189 = vmatprep.subr.mxu0 0.0
        %1190 = vmatpush1.xpose.msra.mxu0 0.0
        %1191 = vmatprep.subr.mxu0 0.0
        %1192 = vmatpush1.xpose.msra.mxu0 0.0
        %1193 = vmatprep.subr.mxu0 0.0
        %1194 = vmatpush1.xpose.msra.mxu0 0.0
        %1195 = vmatprep.subr.mxu0 0.0
        %1196 = vmatpush1.xpose.msra.mxu0 0.0
        %1197 = vmatprep.subr.mxu0 0.0
        %1198 = vmatpush1.xpose.msra.mxu0 0.0
        %1199 = vmatprep.subr.mxu0 0.0
        %1200 = vmatpush1.xpose.msra.mxu0 0.0
        %1201 = vmatprep.subr.mxu0 0.0
        %1202 = vmatpush1.xpose.msra.mxu0 0.0
        %1203 = vmatprep.subr.mxu0 0.0
        %1204 = vmatpush1.xpose.msra.mxu0 0.0
        %1205 = vmatprep.subr.mxu0 0.0
        %1206 = vmatpush1.xpose.msra.mxu0 0.0
        %1207 = vmatprep.subr.mxu0 0.0
        %1208 = vmatpush1.xpose.msra.mxu0 0.0
        %1209 = vmatprep.subr.mxu0 0.0
        %1210 = vmatpush1.xpose.msra.mxu0 0.0
        %1211 = vmatprep.subr.mxu0 0.0
        %1212 = vmatpush1.xpose.msra.mxu0 0.0
        %1213 = vmatprep.subr.mxu0 0.0
        %1214 = vmatpush1.xpose.msra.mxu0 0.0
        %1215 = vmatprep.subr.mxu0 0.0
        %1216 = vmatpush1.xpose.msra.mxu0 0.0
        %1217 = vmatprep.subr.mxu0 0.0
        %1218 = vmatpush1.xpose.msra.mxu0 0.0
        %1219 = vmatprep.subr.mxu0 0.0
        %1220 = vmatpush1.xpose.msra.mxu0 0.0
        %1221 = vmatprep.subr.mxu0 0.0
        %1222 = vmatpush1.xpose.msra.mxu0 0.0
        %1223 = vmatprep.mubr.f32.mxu0 0.0
        %1224 = vmatmul.mubr.f32.gmra.mrb[0].mxu0 %v1157
        %v1225 = vpop.f32.mrb[0].mxu0
        %v1226 = vadd.f32 0.0, %v1225
        %v1227 = vpop.f32.mrb[0].mxu0
        %1228 = vdwg.mxu0
        %v1229 = vmul.f32 %v1226, 0.25
        %v1230 = vsel %vm659, %v1229, -1e+30
        %v1231 = vsel %vm740, %v1230, -inf
        %1232 = vmax.xlane.f32.xlu0 %v1231
        %v1233 = vpop.xlane.xlu0 %1232
        %v1234 = vsub.f32 %v1230, %v1233
        %v1235 = vmul.f32 %v1234, 1.442695
        %v1236 = vpow.pop %v1235
        %v1237 = vsel %vm740, %v1236, 0.0
        %1238 = vadd.xlane.f32.xlu0 %v1237
        %v1239 = vpop.xlane.xlu0 %1238
        %v1240 = vrcp.pop %v1239
        %v1241 = vmul.f32 %v1236, %v1240
        %v1243 = vsel %vm740, %v1241, 0
        %1245 = vmatprep.subr.mxu0 0.0
        %1246 = vmatpush1.msra.mxu0 %v1080
        %1247 = vmatprep.subr.mxu0 0.0
        %1248 = vmatpush1.msra.mxu0 0.0
        %1249 = vmatprep.subr.mxu0 0.0
        %1250 = vmatpush1.msra.mxu0 0.0
        %1251 = vmatprep.subr.mxu0 0.0
        %1252 = vmatpush1.msra.mxu0 0.0
        %1253 = vmatprep.subr.mxu0 0.0
        %1254 = vmatpush1.msra.mxu0 0.0
        %1255 = vmatprep.subr.mxu0 0.0
        %1256 = vmatpush1.msra.mxu0 0.0
        %1257 = vmatprep.subr.mxu0 0.0
        %1258 = vmatpush1.msra.mxu0 0.0
        %1259 = vmatprep.subr.mxu0 0.0
        %1260 = vmatpush1.msra.mxu0 0.0
        %1261 = vmatprep.subr.mxu0 0.0
        %1262 = vmatpush1.msra.mxu0 0.0
        %1263 = vmatprep.subr.mxu0 0.0
        %1264 = vmatpush1.msra.mxu0 0.0
        %1265 = vmatprep.subr.mxu0 0.0
        %1266 = vmatpush1.msra.mxu0 0.0
        %1267 = vmatprep.subr.mxu0 0.0
        %1268 = vmatpush1.msra.mxu0 0.0
        %1269 = vmatprep.subr.mxu0 0.0
        %1270 = vmatpush1.msra.mxu0 0.0
        %1271 = vmatprep.subr.mxu0 0.0
        %1272 = vmatpush1.msra.mxu0 0.0
        %1273 = vmatprep.subr.mxu0 0.0
        %1274 = vmatpush1.msra.mxu0 0.0
        %1275 = vmatprep.subr.mxu0 0.0
        %1276 = vmatpush1.msra.mxu0 0.0
        %1277 = vmatprep.subr.mxu0 0.0
        %1278 = vmatpush1.msra.mxu0 0.0
        %1279 = vmatprep.subr.mxu0 0.0
        %1280 = vmatpush1.msra.mxu0 0.0
        %1281 = vmatprep.subr.mxu0 0.0
        %1282 = vmatpush1.msra.mxu0 0.0
        %1283 = vmatprep.subr.mxu0 0.0
        %1284 = vmatpush1.msra.mxu0 0.0
        %1285 = vmatprep.subr.mxu0 0.0
        %1286 = vmatpush1.msra.mxu0 0.0
        %1287 = vmatprep.subr.mxu0 0.0
        %1288 = vmatpush1.msra.mxu0 0.0
        %1289 = vmatprep.subr.mxu0 0.0
        %1290 = vmatpush1.msra.mxu0 0.0
        %1291 = vmatprep.subr.mxu0 0.0
        %1292 = vmatpush1.msra.mxu0 0.0
        %1293 = vmatprep.subr.mxu0 0.0
        %1294 = vmatpush1.msra.mxu0 0.0
        %1295 = vmatprep.subr.mxu0 0.0
        %1296 = vmatpush1.msra.mxu0 0.0
        %1297 = vmatprep.subr.mxu0 0.0
        %1298 = vmatpush1.msra.mxu0 0.0
        %1299 = vmatprep.subr.mxu0 0.0
        %1300 = vmatpush1.msra.mxu0 0.0
        %1301 = vmatprep.subr.mxu0 0.0
        %1302 = vmatpush1.msra.mxu0 0.0
        %1303 = vmatprep.subr.mxu0 0.0
        %1304 = vmatpush1.msra.mxu0 0.0
        %1305 = vmatprep.subr.mxu0 0.0
        %1306 = vmatpush1.msra.mxu0 0.0
        %1307 = vmatprep.subr.mxu0 0.0
        %1308 = vmatpush1.msra.mxu0 0.0
        %1309 = vmatprep.mubr.f32.mxu0 0.0
        %1310 = vmatmul.mubr.f32.gmra.mrb[0].mxu0 %v1243
        %v1311 = vpop.f32.mrb[0].mxu0
        %v1312 = vadd.f32 0.0, %v1311
        %v1313 = vpop.f32.mrb[0].mxu0
        %1314 = vdwg.mxu0
        %1316 = vrot.lane.b32.xlu0 %v985, 16
        %v1317 = vpop.permute.xlu0 %1316
        %1320 = vrot.lane.b32.xlu0 %v1152, 32
        %v1321 = vpop.permute.xlu0 %1320
        %1324 = vrot.lane.b32.xlu0 %v1312, 48
        %v1325 = vpop.permute.xlu0 %1324
        %v1327 = vsel %vm663, %v825, %v1317
        %vm1328 = vcmask 261120
        %v1329 = vsel %vm1328, %v1327, %v1321
        %vm1330 = vcmask 392192
        %v1331 = vsel %vm1330, %v1329, %v1325
        %v1332 = vpack.c.bf16 %v1331, %v1331
        %v1333 = vld [vmem:[%s447] sm:$0xf]
        %v1334 = vld [vmem:[%s447 + $0x4] sm:$0xf]
        %v1335 = vld [vmem:[%s447 + $0x8] sm:$0xf]
        %v1336 = vld [vmem:[%s447 + $0xc] sm:$0xf]
        %v1337 = vld [vmem:[%s447 + $0x10] sm:$0xf]
        %v1338 = vld [vmem:[%s447 + $0x14] sm:$0xf]
        %v1339 = vld [vmem:[%s447 + $0x18] sm:$0xf]
        %v1340 = vld [vmem:[%s447 + $0x1c] sm:$0xf]
        %v1349 = vunpack.c.l.b16 %v1333
        %v1350 = vunpack.c.l.b16 %v1334
        %v1351 = vunpack.c.l.b16 %v1335
        %v1352 = vunpack.c.l.b16 %v1336
        %v1353 = vunpack.c.l.b16 %v1337
        %v1354 = vunpack.c.l.b16 %v1338
        %v1355 = vunpack.c.l.b16 %v1339
        %v1356 = vunpack.c.l.b16 %v1340
        %v1357 = vpack.c.b16 %v1350, %v1349
        %v1358 = vpack.c.b16 %v1352, %v1351
        %v1359 = vpack.c.b16 %v1354, %v1353
        %v1360 = vpack.c.b16 %v1356, %v1355
        %v1366 = vsel %vm471, %v1332, 0
        %1368 = vmatprep.subr.bf16.mxu0 0
        %1369 = vmatpush1.bf16.msra.mxu0 %v1357
        %1370 = vmatprep.subr.bf16.mxu0 0
        %1371 = vmatpush1.bf16.msra.mxu0 %v1358
        %1372 = vmatprep.subr.bf16.mxu0 0
        %1373 = vmatpush1.bf16.msra.mxu0 %v1359
        %1374 = vmatprep.subr.bf16.mxu0 0
        %1375 = vmatpush1.bf16.msra.mxu0 %v1360
        %1376 = vmatprep.subr.bf16.mxu0 0
        %1377 = vmatpush1.bf16.msra.mxu0 0
        %1378 = vmatprep.subr.bf16.mxu0 0
        %1379 = vmatpush1.bf16.msra.mxu0 0
        %1380 = vmatprep.subr.bf16.mxu0 0
        %1381 = vmatpush1.bf16.msra.mxu0 0
        %1382 = vmatprep.subr.bf16.mxu0 0
        %1383 = vmatpush1.bf16.msra.mxu0 0
        %1384 = vmatprep.subr.bf16.mxu0 0
        %1385 = vmatpush1.bf16.msra.mxu0 0
        %1386 = vmatprep.subr.bf16.mxu0 0
        %1387 = vmatpush1.bf16.msra.mxu0 0
        %1388 = vmatprep.subr.bf16.mxu0 0
        %1389 = vmatpush1.bf16.msra.mxu0 0
        %1390 = vmatprep.subr.bf16.mxu0 0
        %1391 = vmatpush1.bf16.msra.mxu0 0
        %1392 = vmatprep.subr.bf16.mxu0 0
        %1393 = vmatpush1.bf16.msra.mxu0 0
        %1394 = vmatprep.subr.bf16.mxu0 0
        %1395 = vmatpush1.bf16.msra.mxu0 0
        %1396 = vmatprep.subr.bf16.mxu0 0
        %1397 = vmatpush1.bf16.msra.mxu0 0
        %1398 = vmatprep.subr.bf16.mxu0 0
        %1399 = vmatpush1.bf16.msra.mxu0 0
        %1400 = vmatprep.mubr.bf16.mxu0 0
        %1401 = vmatmul.mubr.bf16.gmra.mrb[0].mxu0 %v1366
        %v1402 = vpop.f32.mrb[0].mxu0
        %v1403 = vadd.f32 0.0, %v1402
        %v1404 = vpop.f32.mrb[0].mxu0
        %v1405 = vpop.f32.mrb[0].mxu0
        %v1406 = vpop.f32.mrb[0].mxu0
        %1407 = vdwg.mxu0
        %v1408 = vadd.f32 %v469, %v1403
        %v1409 = vmul.f32 %v1408, %v1408
        %v1410 = vsel %vm471, %v1409, 0.0
        %1411 = vadd.xlane.f32.xlu0 %v1410
        %v1412 = vpop.xlane.xlu0 %1411
        %v1413 = vmul.f32 %v1412, %v475
        %v1414 = vadd.f32 %v1413, 1e-06
        %v1415 = vrsqrt.pop %v1414
        %v1416 = vmul.f32 %v1408, %v1415
        %v1417 = vld [vmem:[%s450] sm:$0x1]
        %v1419 = vlaneseq
        %v1420 = vshrl.u32 %v1419, 7
        %v1421 = vsub.s32 0, %v1420
        %v1422 = vrot.slane %v1417, %v1421
        %v1424 = vmul.f32 %v1416, %v1422
        %v1425 = vpack.c.bf16 %v1424, %v1424
        %v1426 = vld [vmem:[%s455] sm:$0xff]
        %v1427 = vld [vmem:[%s455 + $0x8] sm:$0xff]
        %v1428 = vld [vmem:[%s455 + $0x10] sm:$0xff]
        %v1429 = vld [vmem:[%s455 + $0x18] sm:$0xff]
        %v1430 = vld [vmem:[%s455 + $0x20] sm:$0xff]
        %v1431 = vld [vmem:[%s455 + $0x28] sm:$0xff]
        %v1432 = vld [vmem:[%s455 + $0x30] sm:$0xff]
        %v1433 = vld [vmem:[%s455 + $0x38] sm:$0xff]
        %v1442 = vunpack.c.l.b16 %v1426
        %v1443 = vunpack.c.h.b16 %v1426
        %v1444 = vunpack.c.l.b16 %v1427
        %v1445 = vunpack.c.h.b16 %v1427
        %v1446 = vunpack.c.l.b16 %v1428
        %v1447 = vunpack.c.h.b16 %v1428
        %v1448 = vunpack.c.l.b16 %v1429
        %v1449 = vunpack.c.h.b16 %v1429
        %v1450 = vunpack.c.l.b16 %v1430
        %v1451 = vunpack.c.h.b16 %v1430
        %v1452 = vunpack.c.l.b16 %v1431
        %v1453 = vunpack.c.h.b16 %v1431
        %v1454 = vunpack.c.l.b16 %v1432
        %v1455 = vunpack.c.h.b16 %v1432
        %v1456 = vunpack.c.l.b16 %v1433
        %v1457 = vunpack.c.h.b16 %v1433
        %v1458 = vpack.c.b16 %v1444, %v1442
        %v1459 = vpack.c.b16 %v1445, %v1443
        %v1460 = vpack.c.b16 %v1448, %v1446
        %v1461 = vpack.c.b16 %v1449, %v1447
        %v1462 = vpack.c.b16 %v1452, %v1450
        %v1463 = vpack.c.b16 %v1453, %v1451
        %v1464 = vpack.c.b16 %v1456, %v1454
        %v1465 = vpack.c.b16 %v1457, %v1455
        %v1475 = vsel %vm471, %v1425, 0
        %1477 = vmatprep.subr.bf16.mxu0 %v1459
        %1478 = vmatpush1.bf16.msra.mxu0 %v1458
        %1479 = vmatprep.subr.bf16.mxu0 %v1461
        %1480 = vmatpush1.bf16.msra.mxu0 %v1460
        %1481 = vmatprep.subr.bf16.mxu0 %v1463
        %1482 = vmatpush1.bf16.msra.mxu0 %v1462
        %1483 = vmatprep.subr.bf16.mxu0 %v1465
        %1484 = vmatpush1.bf16.msra.mxu0 %v1464
        %1485 = vmatprep.subr.bf16.mxu0 0
        %1486 = vmatpush1.bf16.msra.mxu0 0
        %1487 = vmatprep.subr.bf16.mxu0 0
        %1488 = vmatpush1.bf16.msra.mxu0 0
        %1489 = vmatprep.subr.bf16.mxu0 0
        %1490 = vmatpush1.bf16.msra.mxu0 0
        %1491 = vmatprep.subr.bf16.mxu0 0
        %1492 = vmatpush1.bf16.msra.mxu0 0
        %1493 = vmatprep.subr.bf16.mxu0 0
        %1494 = vmatpush1.bf16.msra.mxu0 0
        %1495 = vmatprep.subr.bf16.mxu0 0
        %1496 = vmatpush1.bf16.msra.mxu0 0
        %1497 = vmatprep.subr.bf16.mxu0 0
        %1498 = vmatpush1.bf16.msra.mxu0 0
        %1499 = vmatprep.subr.bf16.mxu0 0
        %1500 = vmatpush1.bf16.msra.mxu0 0
        %1501 = vmatprep.subr.bf16.mxu0 0
        %1502 = vmatpush1.bf16.msra.mxu0 0
        %1503 = vmatprep.subr.bf16.mxu0 0
        %1504 = vmatpush1.bf16.msra.mxu0 0
        %1505 = vmatprep.subr.bf16.mxu0 0
        %1506 = vmatpush1.bf16.msra.mxu0 0
        %1507 = vmatprep.subr.bf16.mxu0 0
        %1508 = vmatpush1.bf16.msra.mxu0 0
        %1509 = vmatprep.mubr.bf16.mxu0 0
        %1510 = vmatmul.mubr.bf16.gmra.mrb[0].mxu0 %v1475
        %v1511 = vpop.f32.mrb[0].mxu0
        %v1512 = vadd.f32 0.0, %v1511
        %v1513 = vpop.f32.mrb[0].mxu0
        %v1514 = vadd.f32 0.0, %v1513
        %v1515 = vpop.f32.mrb[0].mxu0
        %v1516 = vpop.f32.mrb[0].mxu0
        %1517 = vdwg.mxu0
        %v1518 = vxor.u32 %v1512, 2147483648
        %v1519 = vmul.f32 %v1518, 1.442695
        %v1520 = vpow.pop %v1519
        %v1521 = vadd.f32 %v1520, 1.0
        %v1522 = vrcp.pop %v1521
        %v1523 = vmul.f32 1.0, %v1522
        %v1524 = vmul.f32 %v1512, %v1523
        %v1525 = vmul.f32 %v1524, %v1514
        %v1526 = vpack.c.bf16 %v1525, %v1525
        %v1527 = vld [vmem:[%s460] sm:$0xf]
        %v1528 = vld [vmem:[%s460 + $0x4] sm:$0xf]
        %v1529 = vld [vmem:[%s460 + $0x8] sm:$0xf]
        %v1530 = vld [vmem:[%s460 + $0xc] sm:$0xf]
        %v1531 = vld [vmem:[%s460 + $0x10] sm:$0xf]
        %v1532 = vld [vmem:[%s460 + $0x14] sm:$0xf]
        %v1533 = vld [vmem:[%s460 + $0x18] sm:$0xf]
        %v1534 = vld [vmem:[%s460 + $0x1c] sm:$0xf]
        %v1535 = vld [vmem:[%s460 + $0x20] sm:$0xf]
        %v1536 = vld [vmem:[%s460 + $0x24] sm:$0xf]
        %v1537 = vld [vmem:[%s460 + $0x28] sm:$0xf]
        %v1538 = vld [vmem:[%s460 + $0x2c] sm:$0xf]
        %v1539 = vld [vmem:[%s460 + $0x30] sm:$0xf]
        %v1540 = vld [vmem:[%s460 + $0x34] sm:$0xf]
        %v1541 = vld [vmem:[%s460 + $0x38] sm:$0xf]
        %v1542 = vld [vmem:[%s460 + $0x3c] sm:$0xf]
        %v1559 = vunpack.c.l.b16 %v1527
        %v1560 = vunpack.c.l.b16 %v1528
        %v1561 = vunpack.c.l.b16 %v1529
        %v1562 = vunpack.c.l.b16 %v1530
        %v1563 = vunpack.c.l.b16 %v1531
        %v1564 = vunpack.c.l.b16 %v1532
        %v1565 = vunpack.c.l.b16 %v1533
        %v1566 = vunpack.c.l.b16 %v1534
        %v1567 = vunpack.c.l.b16 %v1535
        %v1568 = vunpack.c.l.b16 %v1536
        %v1569 = vunpack.c.l.b16 %v1537
        %v1570 = vunpack.c.l.b16 %v1538
        %v1571 = vunpack.c.l.b16 %v1539
        %v1572 = vunpack.c.l.b16 %v1540
        %v1573 = vunpack.c.l.b16 %v1541
        %v1574 = vunpack.c.l.b16 %v1542
        %v1575 = vpack.c.b16 %v1560, %v1559
        %v1576 = vpack.c.b16 %v1562, %v1561
        %v1577 = vpack.c.b16 %v1564, %v1563
        %v1578 = vpack.c.b16 %v1566, %v1565
        %v1579 = vpack.c.b16 %v1568, %v1567
        %v1580 = vpack.c.b16 %v1570, %v1569
        %v1581 = vpack.c.b16 %v1572, %v1571
        %v1582 = vpack.c.b16 %v1574, %v1573
        %1591 = vmatprep.subr.bf16.mxu0 0
        %1592 = vmatpush1.bf16.msra.mxu0 %v1575
        %1593 = vmatprep.subr.bf16.mxu0 0
        %1594 = vmatpush1.bf16.msra.mxu0 %v1576
        %1595 = vmatprep.subr.bf16.mxu0 0
        %1596 = vmatpush1.bf16.msra.mxu0 %v1577
        %1597 = vmatprep.subr.bf16.mxu0 0
        %1598 = vmatpush1.bf16.msra.mxu0 %v1578
        %1599 = vmatprep.subr.bf16.mxu0 0
        %1600 = vmatpush1.bf16.msra.mxu0 %v1579
        %1601 = vmatprep.subr.bf16.mxu0 0
        %1602 = vmatpush1.bf16.msra.mxu0 %v1580
        %1603 = vmatprep.subr.bf16.mxu0 0
        %1604 = vmatpush1.bf16.msra.mxu0 %v1581
        %1605 = vmatprep.subr.bf16.mxu0 0
        %1606 = vmatpush1.bf16.msra.mxu0 %v1582
        %1607 = vmatprep.subr.bf16.mxu0 0
        %1608 = vmatpush1.bf16.msra.mxu0 0
        %1609 = vmatprep.subr.bf16.mxu0 0
        %1610 = vmatpush1.bf16.msra.mxu0 0
        %1611 = vmatprep.subr.bf16.mxu0 0
        %1612 = vmatpush1.bf16.msra.mxu0 0
        %1613 = vmatprep.subr.bf16.mxu0 0
        %1614 = vmatpush1.bf16.msra.mxu0 0
        %1615 = vmatprep.subr.bf16.mxu0 0
        %1616 = vmatpush1.bf16.msra.mxu0 0
        %1617 = vmatprep.subr.bf16.mxu0 0
        %1618 = vmatpush1.bf16.msra.mxu0 0
        %1619 = vmatprep.subr.bf16.mxu0 0
        %1620 = vmatpush1.bf16.msra.mxu0 0
        %1621 = vmatprep.subr.bf16.mxu0 0
        %1622 = vmatpush1.bf16.msra.mxu0 0
        %1623 = vmatprep.mubr.bf16.mxu0 0
        %1624 = vmatmul.mubr.bf16.gmra.mrb[0].mxu0 %v1526
        %v1625 = vpop.f32.mrb[0].mxu0
        %v1626 = vadd.f32 0.0, %v1625
        %v1627 = vpop.f32.mrb[0].mxu0
        %v1628 = vpop.f32.mrb[0].mxu0
        %v1629 = vpop.f32.mrb[0].mxu0
        %1630 = vdwg.mxu0
        %v1631 = vadd.f32 %v1408, %v1626
        %1632 = vst.msk [vmem:[#allocation2] sm:$0xff] %vm471, %v1631
        %p1633 = scmp.eq.s32.totalorder %s23, 1
        // Predicated region
        $region69: #{llama_forward.1} parent=63 // pred_check
          %p1634 = pneg %p1633
        $region70: #{llama_forward.1} parent=63 // pred_check_branch
          %1636 = sbr.rel (%p1634) target = $region72
        $region71: #{llama_forward.1} parent=63 // pred_region
          %v1637 = vmul.f32 %v1631, %v1631
          %v1638 = vsel %vm471, %v1637, 0.0
          %1639 = vadd.xlane.f32.xlu0 %v1638
          %v1640 = vpop.xlane.xlu0 %1639
          %v1641 = vmul.f32 %v1640, %v475
          %v1642 = vadd.f32 %v1641, 1e-06
          %v1643 = vrsqrt.pop %v1642
          %v1644 = vmul.f32 %v1631, %v1643
          %v1645 = vld [vmem:[%s10] sm:$0x1]
          %v1647 = vlaneseq
          %v1648 = vshrl.u32 %v1647, 7
          %v1649 = vsub.s32 0, %v1648
          %v1650 = vrot.slane %v1645, %v1649
          %v1652 = vmul.f32 %v1644, %v1650
          %1653 = vst.msk [vmem:[#allocation3] sm:$0xff] %vm471, %v1652
        $region72: #{llama_forward.1} parent=63 // pred_fallthru
          _
        // Predicated region
        $region73: #{llama_forward.1} parent=63 // pred_check
          %p1654 = pneg %p297
        $region74: #{llama_forward.1} parent=63 // pred_check_branch
          %1656 = sbr.rel (%p1654) target = $region76
        $region75: #{llama_forward.1} parent=63 // pred_region
          %s1658 = ssub.s32 128, 128
          %1659 = vsyncadd [#allocation4], %s1658
          %s1661 = sshll.u32 [#allocation3], 4
          %s1662 = int_to_ptr.vmem [resolvable:$true] %s1661
          %1664 = dma.vmem_to_hbm [thread:$0]  %s1662, 128, %s11, [#allocation4]
        $region76: #{llama_forward.1} parent=63 // pred_fallthru
          _
        // Predicated region
        $region77: #{llama_forward.1} parent=63 // pred_check
          %p1665 = pneg %p297
        $region78: #{llama_forward.1} parent=63 // pred_check_branch
          %1667 = sbr.rel (%p1665) target = $region80
        $region79: #{llama_forward.1} parent=63 // pred_region
          %1668 = dma.done [#allocation4], 128
        $region80: #{llama_forward.1} parent=63 // pred_fallthru
          _
      $region64: #{llama_forward.1} parent=5 // pred_fallthru
        _
      %p1669 = scmp.le.s32.totalorder 2, %s18
      // Predicated region
      $region81: #{llama_forward.1} parent=5 // pred_check
        %p1670 = pneg %p1669
      $region82: #{llama_forward.1} parent=5 // pred_check_branch
        %1672 = sbr.rel (%p1670) target = $region84
      $region83: #{llama_forward.1} parent=5 // pred_region
        %s1673 = ssub.s32 %s18, 2
      $region84: #{llama_forward.1} parent=5 // pred_fallthru
        _
    $region6: #{llama_forward.1} parent=1 // loop_footer
      %s22 = sadd.s32 1, %s18
    $region7: #{llama_forward.1} parent=1 // loop_footer_branch
      %17 = sbr.rel target = $region3
    $region8: #{llama_forward.1} parent=1 // loop_exit
      _
    %1674 = vsyncpa [#allocation4], 1
    %s1675 = scalar_lea.sflag [#allocation4], 1
    %1676 = vsyncpa %s1675, 1

</llo_original>
